<compile_context>
chip_gen: v7x
topology: tpu7x:2x2x1
jax: 0.10.0
libtpu: 0.0.40
codegen_flags: <defaults>
</compile_context>

<pallas_src>
import functools

import jax
import jax.numpy as jnp
from jax.experimental import pallas as pl
from jax.experimental.pallas import tpu as pltpu

_LN_EPS = 1e-5  # PyTorch nn.LayerNorm default


def _transform(ctx, cp_ref):
    """Depthwise 1x1 conv + LayerNorm([C,1,1]) on a (C, 1) context vector."""
    wdw = cp_ref[:, 0:1]
    bdw = cp_ref[:, 1:2]
    gamma = cp_ref[:, 2:3]
    beta = cp_ref[:, 3:4]
    t = ctx * wdw + bdw
    mean = jnp.mean(t, keepdims=True)
    var = jnp.mean((t - mean) ** 2, keepdims=True)          # biased, as PyTorch
    t_hat = (t - mean) * jax.lax.rsqrt(var + _LN_EPS)
    return t_hat * gamma + beta                              # (C, 1)


def _fusion_vec(t_hat, alpha, fusion_manner, out_dtype):
    if fusion_manner == "add":
        return (alpha * t_hat).astype(out_dtype)
    return jax.nn.sigmoid(t_hat).astype(out_dtype)


# --------------------------------------------------------------------------
# Single-pass kernel: whole (C, HW) per batch element, Bt elements per step.
# --------------------------------------------------------------------------
def _gsa_single_kernel(wm_ref, cp_ref, scal_ref, x_ref, o_ref, *,
                       fusion_manner, bt, prec):
    bm = scal_ref[0]
    alpha = scal_ref[1]
    wm = wm_ref[...]                                         # (1, C) f32

    for b in range(bt):                                      # static unroll
        x = x_ref[b]                                         # (C, HW) io dtype
        wm_k = wm if x.dtype == jnp.float32 else wm.astype(x.dtype)

        # conv_mask: 1x1 conv C->1 as MXU matmul; accumulate in f32.
        logits = jnp.dot(wm_k, x, preferred_element_type=jnp.float32,
                         precision=prec) + bm                # (1, HW)

        # softmax over HW with deferred normalization.
        m = jnp.max(logits, axis=-1, keepdims=True)
        e = jnp.exp(logits - m)                              # (1, HW) f32
        s = jnp.sum(e, axis=-1, keepdims=True)               # (1, 1)

        # context = x @ e^T (contract the lane/HW dim) on the MXU.
        e_k = e if x.dtype == jnp.float32 else e.astype(x.dtype)
        ctx = jax.lax.dot_general(x, e_k, (((1,), (1,)), ((), ())),
                                  preferred_element_type=jnp.float32,
                                  precision=prec)            # (C, 1)
        ctx = ctx / s                                        # one divide per batch

        t_hat = _transform(ctx, cp_ref)                      # (C, 1) f32
        vec = _fusion_vec(t_hat, alpha, fusion_manner, o_ref.dtype)

        # Epilogue in the I/O dtype: only the (C,1) vector was cast.
        if fusion_manner == "add":
            o_ref[b] = (x + vec).astype(o_ref.dtype)
        else:
            o_ref[b] = (x * vec).astype(o_ref.dtype)


# --------------------------------------------------------------------------
# Two-pass fallback, pass 1: online-softmax reduction over HW tiles.
# Emits the per-batch fusion vector (alpha*t_hat or sigmoid(t_hat)).
# --------------------------------------------------------------------------
def _gsa_stats_kernel(wm_ref, cp_ref, scal_ref, x_ref, vec_ref,
                      m_scr, s_scr, ctx_scr, *,
                      fusion_manner, hw, tile, prec):
    hw_i = pl.program_id(1)
    n_hw = pl.num_programs(1)

    @pl.when(hw_i == 0)
    def _():
        m_scr[...] = jnp.full_like(m_scr, -jnp.inf)
        s_scr[...] = jnp.zeros_like(s_scr)
        ctx_scr[...] = jnp.zeros_like(ctx_scr)

    x = x_ref[0]                                             # (C, T) io dtype
    wm = wm_ref[...]
    wm_k = wm if x.dtype == jnp.float32 else wm.astype(x.dtype)

    if hw % tile != 0:
        # Last tile is partial: zero the out-of-range lanes of x and push the
        # corresponding logits to -inf so they contribute nothing.
        lane = jax.lax.broadcasted_iota(jnp.int32, (1, tile), 1) + hw_i * tile
        valid = lane < hw
        x = jnp.where(valid, x, jnp.zeros_like(x))
        logits = jnp.dot(wm_k, x, preferred_element_type=jnp.float32,
                         precision=prec) + scal_ref[0]
        logits = jnp.where(valid, logits, -jnp.inf)
    else:
        logits = jnp.dot(wm_k, x, preferred_element_type=jnp.float32,
                         precision=prec) + scal_ref[0]       # (1, T)

    m_old = m_scr[...]
    m_new = jnp.maximum(m_old, jnp.max(logits, axis=-1, keepdims=True))
    a = jnp.exp(m_old - m_new)                               # rescale factor
    e = jnp.exp(logits - m_new)                              # (1, T) f32

    e_k = e if x.dtype == jnp.float32 else e.astype(x.dtype)
    ctx_part = jax.lax.dot_general(x, e_k, (((1,), (1,)), ((), ())),
                                   preferred_element_type=jnp.float32,
                                   precision=prec)           # (C, 1)

    s_scr[...] = a * s_scr[...] + jnp.sum(e, axis=-1, keepdims=True)
    ctx_scr[...] = a * ctx_scr[...] + ctx_part
    m_scr[...] = m_new

    @pl.when(hw_i == n_hw - 1)
    def _():
        ctx = ctx_scr[...] / s_scr[...]
        t_hat = _transform(ctx, cp_ref)
        vec_ref[0] = _fusion_vec(t_hat, scal_ref[1], fusion_manner,
                                 vec_ref.dtype)


# --------------------------------------------------------------------------
# Two-pass fallback, pass 2: tiled elementwise broadcast apply.
# --------------------------------------------------------------------------
def _gsa_apply_kernel(vec_ref, x_ref, o_ref, *, fusion_manner):
    v = vec_ref[0].astype(o_ref.dtype)                       # (C, 1), tiny cast
    if fusion_manner == "add":
        o_ref[0] = (x_ref[0] + v).astype(o_ref.dtype)
    else:
        o_ref[0] = (x_ref[0] * v).astype(o_ref.dtype)


# --------------------------------------------------------------------------
# Wrapper
# --------------------------------------------------------------------------
@functools.partial(jax.jit, static_argnames=("fusion_manner", "io_dtype",
                                              "force_two_pass", "hw_tile"))
def gsa_forward(x_nchw, params, fusion_manner="add", io_dtype=None,
                force_two_pass=False, hw_tile=None):
    """Pallas implementation of GSA_Module.forward.

    x_nchw: (B, C, H, W)
    params: dict with wm (C,1), bm (1,1), wdw (C,1), bdw (C,1),
            gamma (C,1), beta (C,1), alpha (1,1)
    io_dtype: optional HBM I/O dtype (e.g. jnp.bfloat16 to halve traffic).
    force_two_pass / hw_tile: testing knobs for the HW-tiled fallback.
    """
    assert fusion_manner in ("add", "mul")
    B, C, H, W = x_nchw.shape
    HW = H * W
    io_dtype = jnp.dtype(x_nchw.dtype if io_dtype is None else io_dtype)
    itemsize = io_dtype.itemsize

    x = x_nchw.reshape(B, C, HW)                             # bitcast, free
    if x.dtype != io_dtype:
        # TODO(synk): a standalone cast is an extra HBM traversal; in a real
        # model keep activations in io_dtype end-to-end instead.
        x = x.astype(io_dtype)

    # Pack per-channel vectors into one VMEM input; true scalars into SMEM.
    wm_row = params["wm"].reshape(1, C).astype(jnp.float32)
    cparams = jnp.concatenate(
        [params["wdw"].reshape(C, 1), params["bdw"].reshape(C, 1),
         params["gamma"].reshape(C, 1), params["beta"].reshape(C, 1)],
        axis=1).astype(jnp.float32)                          # (C, 4)
    scalars = jnp.stack(
        [params["bm"].reshape(()), params["alpha"].reshape(())]
    ).astype(jnp.float32)                                    # (2,)

    # Chip-aware VMEM budget (v7x: 64 MiB/TC, v5e/v6e: 128 MiB).
    try:
        vmem_cap = int(pltpu.get_tpu_info().vmem_capacity_bytes)
    except Exception:
        vmem_cap = 64 << 20                                  # conservative
    budget = (vmem_cap * 3) // 4

    prec = (jax.lax.Precision.HIGHEST if io_dtype == jnp.dtype(jnp.float32)
            else None)

    cost = pl.CostEstimate(flops=4 * B * C * HW,
                           transcendentals=B * HW,
                           bytes_accessed=2 * B * C * HW * itemsize)

    blk1 = C * HW * itemsize                                 # one batch element
    single_needed = 4 * blk1 + 2 * HW * 4 + (2 << 20)        # dbl-buffered in+out
    use_single = (not force_two_pass) and (single_needed <= budget)

    if use_single:
        # Pack Bt batch elements per grid step for tiny feature maps.
        bt = 1
        if blk1 < (1 << 20):
            for cand in range(min(B, 8), 0, -1):
                if B % cand == 0 and 4 * cand * blk1 + 2 * cand * HW * 4 + (2 << 20) <= budget:
                    bt = cand
                    break
        needed = 4 * bt * blk1 + 2 * bt * HW * 4 + (2 << 20)
        vmem_limit = int(min(max(needed, 32 << 20), vmem_cap - (4 << 20)))

        kernel = functools.partial(_gsa_single_kernel,
                                   fusion_manner=fusion_manner, bt=bt, prec=prec)
        out = pl.pallas_call(
            kernel,
            out_shape=jax.ShapeDtypeStruct((B, C, HW), io_dtype),
            grid_spec=pltpu.PrefetchScalarGridSpec(
                num_scalar_prefetch=0,
                grid=(B // bt,),
                in_specs=[
                    pl.BlockSpec((1, C), lambda i: (0, 0)),
                    pl.BlockSpec((C, 4), lambda i: (0, 0)),
                    pl.BlockSpec(memory_space=pltpu.MemorySpace.SMEM),
                    pl.BlockSpec((bt, C, HW), lambda i: (i, 0, 0)),
                ],
                out_specs=pl.BlockSpec((bt, C, HW), lambda i: (i, 0, 0)),
            ),
            compiler_params=pltpu.CompilerParams(
                dimension_semantics=("parallel",),
                vmem_limit_bytes=vmem_limit),
            cost_estimate=cost,
        )(wm_row, cparams, scalars, x)
    else:
        # ---- two-pass HW-tiled fallback ----
        if hw_tile is None:
            T = 128
            for cand in (2048, 1024, 512, 256, 128):
                if 6 * C * cand * itemsize + (2 << 20) <= budget:
                    T = cand
                    break
        else:
            T = int(hw_tile)
        n_hw = -(-HW // T)
        vmem_limit = int(min(max(8 * C * T * itemsize + (4 << 20), 32 << 20),
                             vmem_cap - (4 << 20)))

        stats_kernel = functools.partial(_gsa_stats_kernel,
                                         fusion_manner=fusion_manner,
                                         hw=HW, tile=T, prec=prec)
        vec = pl.pallas_call(
            stats_kernel,
            out_shape=jax.ShapeDtypeStruct((B, C, 1), jnp.float32),
            grid_spec=pltpu.PrefetchScalarGridSpec(
                num_scalar_prefetch=0,
                grid=(B, n_hw),
                in_specs=[
                    pl.BlockSpec((1, C), lambda b, h: (0, 0)),
                    pl.BlockSpec((C, 4), lambda b, h: (0, 0)),
                    pl.BlockSpec(memory_space=pltpu.MemorySpace.SMEM),
                    pl.BlockSpec((1, C, T), lambda b, h: (b, 0, h)),
                ],
                out_specs=pl.BlockSpec((1, C, 1), lambda b, h: (b, 0, 0)),
                scratch_shapes=[pltpu.VMEM((1, 1), jnp.float32),   # running max
                                pltpu.VMEM((1, 1), jnp.float32),   # running sum
                                pltpu.VMEM((C, 1), jnp.float32)],  # running ctx
            ),
            compiler_params=pltpu.CompilerParams(
                dimension_semantics=("parallel", "arbitrary"),
                vmem_limit_bytes=vmem_limit),
            cost_estimate=pl.CostEstimate(flops=4 * B * C * HW,
                                          transcendentals=B * HW,
                                          bytes_accessed=B * C * HW * itemsize),
        )(wm_row, cparams, scalars, x)

        apply_kernel = functools.partial(_gsa_apply_kernel,
                                         fusion_manner=fusion_manner)
        out = pl.pallas_call(
            apply_kernel,
            out_shape=jax.ShapeDtypeStruct((B, C, HW), io_dtype),
            grid_spec=pltpu.PrefetchScalarGridSpec(
                num_scalar_prefetch=0,
                grid=(B, n_hw),
                in_specs=[
                    pl.BlockSpec((1, C, 1), lambda b, h: (b, 0, 0)),
                    pl.BlockSpec((1, C, T), lambda b, h: (b, 0, h)),
                ],
                out_specs=pl.BlockSpec((1, C, T), lambda b, h: (b, 0, h)),
            ),
            compiler_params=pltpu.CompilerParams(
                dimension_semantics=("parallel", "parallel"),
                vmem_limit_bytes=vmem_limit),
            cost_estimate=pl.CostEstimate(flops=B * C * HW, transcendentals=0,
                                          bytes_accessed=2 * B * C * HW * itemsize),
        )(vec, x)

    out = out.reshape(B, C, H, W)
    if out.dtype != x_nchw.dtype:
        out = out.astype(x_nchw.dtype)
    return out


def gsa_reference(x_nchw, params, fusion_manner="add"):
    """Pure-JAX reference mirroring the PyTorch module semantics."""
    B, C, H, W = x_nchw.shape
    x = x_nchw.reshape(B, C, H * W)
    hp = jax.lax.Precision.HIGHEST

    logits = jnp.einsum("bcs,c->bs", x, params["wm"].reshape(C), precision=hp)
    logits = logits + params["bm"].reshape(())
    p = jax.nn.softmax(logits, axis=-1)

    context = jnp.einsum("bcs,bs->bc", x, p, precision=hp)
    t = context * params["wdw"].reshape(C) + params["bdw"].reshape(C)

    mean = jnp.mean(t, axis=-1, keepdims=True)
    var = jnp.mean((t - mean) ** 2, axis=-1, keepdims=True)
    t_hat = (t - mean) / jnp.sqrt(var + _LN_EPS)
    t_hat = t_hat * params["gamma"].reshape(C) + params["beta"].reshape(C)

    if fusion_manner == "add":
        out = x + params["alpha"].reshape(()) * t_hat[:, :, None]
    else:
        out = x * jax.nn.sigmoid(t_hat)[:, :, None]
    return out.reshape(B, C, H, W)


def init_params(key, C):
    """Deterministic synthetic parameters (shapes match GSA_Module.__init__)."""
    k1, k2, k3 = jax.random.split(key, 3)
    wm = jax.random.normal(k1, (C, 1), jnp.float32) * 0.1
    bm = jnp.full((1, 1), 0.05, jnp.float32)
    wdw = jax.random.normal(k2, (C, 1), jnp.float32) * 0.1 + 1.0
    bdw = jax.random.normal(k3, (C, 1), jnp.float32) * 0.1
    gamma = jnp.ones((C, 1), jnp.float32)
    beta = jnp.zeros((C, 1), jnp.float32)
    alpha = jnp.full((1, 1), 0.3, jnp.float32)   # nonzero so fusion is exercised
    return dict(wm=wm, bm=bm, wdw=wdw, bdw=bdw, gamma=gamma, beta=beta,
                alpha=alpha)


if __name__ == "__main__":
    key = jax.random.PRNGKey(0)
    kx, kp = jax.random.split(key)

    B, C, H, W = 2, 4, 16, 16
    x = jax.random.normal(kx, (B, C, H, W), jnp.float32)
    params = init_params(kp, C)

    TOL = 1e-3       # f32 path uses HIGHEST-precision dots
    TOL_BF16 = 5e-2  # bf16 I/O rounding

    # Single-pass, add.
    out = jax.block_until_ready(gsa_forward(x, params, fusion_manner="add"))
    ref = gsa_reference(x, params, "add")
    assert out.shape == (B, C, H, W)
    assert jnp.allclose(out, ref, atol=TOL, rtol=TOL), "add mismatch"

    # Single-pass, mul.
    out_mul = jax.block_until_ready(gsa_forward(x, params, fusion_manner="mul"))
    ref_mul = gsa_reference(x, params, "mul")
    assert jnp.allclose(out_mul, ref_mul, atol=TOL, rtol=TOL), "mul mismatch"

    # Non-multiple-of-128 spatial size: block == full dims, no pad/slice needed.
    x2 = jax.random.normal(kx, (2, 4, 7, 7), jnp.float32)
    out2 = jax.block_until_ready(gsa_forward(x2, params, fusion_manner="add"))
    ref2 = gsa_reference(x2, params, "add")
    assert jnp.allclose(out2, ref2, atol=TOL, rtol=TOL), "7x7 mismatch"

    # bf16 I/O fast path (halves HBM traffic); math accumulates in f32.
    out_bf16 = jax.block_until_ready(
        gsa_forward(x, params, fusion_manner="add", io_dtype=jnp.bfloat16))
    assert jnp.allclose(out_bf16, ref, atol=TOL_BF16, rtol=TOL_BF16), \
        "bf16 I/O mismatch"

    # Two-pass HW-tiled fallback (forced; exercises online-softmax accumulation
    # across 2 spatial tiles and the parallel elementwise apply pass).
    out_tp = jax.block_until_ready(
        gsa_forward(x, params, fusion_manner="add",
                    force_two_pass=True, hw_tile=128))
    assert jnp.allclose(out_tp, ref, atol=TOL, rtol=TOL), "two-pass add mismatch"

    out_tpm = jax.block_until_ready(
        gsa_forward(x, params, fusion_manner="mul",
                    force_two_pass=True, hw_tile=128))
    assert jnp.allclose(out_tpm, ref_mul, atol=TOL, rtol=TOL), \
        "two-pass mul mismatch"

    print("KERNEL_OK")
</pallas_src>

<mosaic_0001>
module attributes {stable_mosaic.version = 11 : i64} {
  func.func @_gsa_single_kernel(%arg0: i32, %arg1: memref<1x4xf32, #tpu.memory_space<vmem>>, %arg2: memref<4x4xf32, #tpu.memory_space<vmem>>, %arg3: memref<2xf32, #tpu.memory_space<smem>>, %arg4: memref<2x4x256xf32, #tpu.memory_space<vmem>>, %arg5: memref<2x4x256xf32, #tpu.memory_space<vmem>>) attributes {dimension_semantics = [#tpu.dimension_semantics<parallel>], iteration_bounds = array<i64: 1>, scalar_prefetch = 0 : i64, scratch_operands = 0 : i64, tpu.core_type = #tpu.core_type<tc>, window_params = [{pipeline_mode = #tpu.pipeline_mode<synchronous>, transform_indices = @transform_0, window_bounds = array<i64: 1, 4>}, {pipeline_mode = #tpu.pipeline_mode<synchronous>, transform_indices = @transform_1, window_bounds = array<i64: 4, 4>}, {transform_indices = @transform_2, window_bounds = array<i64: 2>}, {transform_indices = @transform_3, window_bounds = array<i64: 2, 4, 256>}, {transform_indices = @transform_4, window_bounds = array<i64: 2, 4, 256>}]} {
    %c0 = arith.constant 0 : index
    %0 = memref.load %arg3[%c0] : memref<2xf32, #tpu.memory_space<smem>>
    %c1 = arith.constant 1 : index
    %1 = memref.load %arg3[%c1] : memref<2xf32, #tpu.memory_space<smem>>
    %c0_0 = arith.constant 0 : index
    %c0_1 = arith.constant 0 : index
    %2 = vector.load %arg1[%c0_0, %c0_1] : memref<1x4xf32, #tpu.memory_space<vmem>>, vector<1x4xf32>
    %c0_2 = arith.constant 0 : index
    %c0_3 = arith.constant 0 : index
    %c0_4 = arith.constant 0 : index
    %3 = vector.load %arg4[%c0_2, %c0_3, %c0_4] : memref<2x4x256xf32, #tpu.memory_space<vmem>>, vector<1x4x256xf32>
    %4 = vector.shape_cast %3 : vector<1x4x256xf32> to vector<4x256xf32>
    %cst = arith.constant dense<0.000000e+00> : vector<1x256xf32>
    %5 = tpu.matmul %2, %4, %cst {dimension_numbers = #tpu.dot_dimension_numbers<[1], [0], [0], [1], [0, 0, 1, 1], [], []>, precision = #tpu.contract_precision<fp32>} : vector<1x4xf32>, vector<4x256xf32>, vector<1x256xf32> -> vector<1x256xf32>
    %6 = vector.broadcast %0 : f32 to vector<1x256xf32>
    %7 = arith.addf %5, %6 : vector<1x256xf32>
    %cst_5 = arith.constant dense<0xFF800000> : vector<1xf32>
    %8 = vector.multi_reduction <maximumf>, %7, %cst_5 [1] : vector<1x256xf32> to vector<1xf32>
    %9 = vector.shape_cast %8 : vector<1xf32> to vector<1x1xf32>
    %10 = vector.broadcast %9 : vector<1x1xf32> to vector<1x256xf32>
    %11 = arith.subf %7, %10 : vector<1x256xf32>
    %12 = math.exp %11 : vector<1x256xf32>
    %cst_6 = arith.constant dense<0.000000e+00> : vector<1xf32>
    %13 = vector.multi_reduction <add>, %12, %cst_6 [1] : vector<1x256xf32> to vector<1xf32>
    %14 = vector.shape_cast %13 : vector<1xf32> to vector<1x1xf32>
    %cst_7 = arith.constant dense<0.000000e+00> : vector<4x1xf32>
    %15 = tpu.matmul %4, %12, %cst_7 {dimension_numbers = #tpu.dot_dimension_numbers<[1], [1], [0], [0], [0, 0, 1, 0], [], []>, precision = #tpu.contract_precision<fp32>} : vector<4x256xf32>, vector<1x256xf32>, vector<4x1xf32> -> vector<4x1xf32>
    %16 = vector.broadcast %14 : vector<1x1xf32> to vector<4x1xf32>
    %17 = arith.divf %15, %16 : vector<4x1xf32>
    %c0_8 = arith.constant 0 : index
    %c0_9 = arith.constant 0 : index
    %18 = vector.load %arg2[%c0_8, %c0_9] : memref<4x4xf32, #tpu.memory_space<vmem>>, vector<4x1xf32>
    %c0_10 = arith.constant 0 : index
    %c1_11 = arith.constant 1 : index
    %19 = vector.load %arg2[%c0_10, %c1_11] : memref<4x4xf32, #tpu.memory_space<vmem>>, vector<4x1xf32>
    %c0_12 = arith.constant 0 : index
    %c2 = arith.constant 2 : index
    %20 = vector.load %arg2[%c0_12, %c2] : memref<4x4xf32, #tpu.memory_space<vmem>>, vector<4x1xf32>
    %c0_13 = arith.constant 0 : index
    %c3 = arith.constant 3 : index
    %21 = vector.load %arg2[%c0_13, %c3] : memref<4x4xf32, #tpu.memory_space<vmem>>, vector<4x1xf32>
    %22 = arith.mulf %17, %18 : vector<4x1xf32>
    %23 = arith.addf %22, %19 : vector<4x1xf32>
    %24 = vector.shape_cast %23 : vector<4x1xf32> to vector<1x4x1xf32>
    %cst_14 = arith.constant dense<0.000000e+00> : vector<1xf32>
    %25 = vector.multi_reduction <add>, %24, %cst_14 [1, 2] : vector<1x4x1xf32> to vector<1xf32>
    %26 = vector.shape_cast %25 : vector<1xf32> to vector<1x1x1xf32>
    %27 = vector.extract %26[0, 0, 0] : f32 from vector<1x1x1xf32>
    %28 = vector.broadcast %27 : f32 to vector<1x1xf32>
    %cst_15 = arith.constant 4.000000e+00 : f32
    %29 = vector.broadcast %cst_15 : f32 to vector<1x1xf32>
    %30 = arith.divf %28, %29 : vector<1x1xf32>
    %31 = vector.broadcast %30 : vector<1x1xf32> to vector<4x1xf32>
    %32 = arith.subf %23, %31 : vector<4x1xf32>
    %33 = arith.mulf %32, %32 : vector<4x1xf32>
    %34 = vector.shape_cast %33 : vector<4x1xf32> to vector<1x4x1xf32>
    %cst_16 = arith.constant dense<0.000000e+00> : vector<1xf32>
    %35 = vector.multi_reduction <add>, %34, %cst_16 [1, 2] : vector<1x4x1xf32> to vector<1xf32>
    %36 = vector.shape_cast %35 : vector<1xf32> to vector<1x1x1xf32>
    %37 = vector.extract %36[0, 0, 0] : f32 from vector<1x1x1xf32>
    %38 = vector.broadcast %37 : f32 to vector<1x1xf32>
    %cst_17 = arith.constant 4.000000e+00 : f32
    %39 = vector.broadcast %cst_17 : f32 to vector<1x1xf32>
    %40 = arith.divf %38, %39 : vector<1x1xf32>
    %41 = vector.broadcast %30 : vector<1x1xf32> to vector<4x1xf32>
    %42 = arith.subf %23, %41 : vector<4x1xf32>
    %cst_18 = arith.constant 9.99999974E-6 : f32
    %43 = vector.broadcast %cst_18 : f32 to vector<1x1xf32>
    %44 = arith.addf %40, %43 : vector<1x1xf32>
    %45 = math.rsqrt %44 : vector<1x1xf32>
    %46 = vector.broadcast %45 : vector<1x1xf32> to vector<4x1xf32>
    %47 = arith.mulf %42, %46 : vector<4x1xf32>
    %48 = arith.mulf %47, %20 : vector<4x1xf32>
    %49 = arith.addf %48, %21 : vector<4x1xf32>
    %50 = vector.broadcast %1 : f32 to vector<4x1xf32>
    %51 = arith.mulf %50, %49 : vector<4x1xf32>
    %52 = vector.broadcast %51 : vector<4x1xf32> to vector<4x256xf32>
    %53 = arith.addf %4, %52 : vector<4x256xf32>
    %c0_19 = arith.constant 0 : index
    %c0_20 = arith.constant 0 : index
    %c0_21 = arith.constant 0 : index
    %54 = vector.load %arg5[%c0_19, %c0_20, %c0_21] : memref<2x4x256xf32, #tpu.memory_space<vmem>>, vector<1x4x256xf32>
    %55 = vector.shape_cast %54 : vector<1x4x256xf32> to vector<4x256xf32>
    %56 = vector.shape_cast %53 : vector<4x256xf32> to vector<1x4x256xf32>
    tpu.vector_store %arg5[%c0_19, %c0_20, %c0_21], %56 {strides = array<i32>} : memref<2x4x256xf32, #tpu.memory_space<vmem>>, vector<1x4x256xf32>,
    %c1_22 = arith.constant 1 : index
    %c0_23 = arith.constant 0 : index
    %c0_24 = arith.constant 0 : index
    %57 = vector.load %arg4[%c1_22, %c0_23, %c0_24] : memref<2x4x256xf32, #tpu.memory_space<vmem>>, vector<1x4x256xf32>
    %58 = vector.shape_cast %57 : vector<1x4x256xf32> to vector<4x256xf32>
    %cst_25 = arith.constant dense<0.000000e+00> : vector<1x256xf32>
    %59 = tpu.matmul %2, %58, %cst_25 {dimension_numbers = #tpu.dot_dimension_numbers<[1], [0], [0], [1], [0, 0, 1, 1], [], []>, precision = #tpu.contract_precision<fp32>} : vector<1x4xf32>, vector<4x256xf32>, vector<1x256xf32> -> vector<1x256xf32>
    %60 = vector.broadcast %0 : f32 to vector<1x256xf32>
    %61 = arith.addf %59, %60 : vector<1x256xf32>
    %cst_26 = arith.constant dense<0xFF800000> : vector<1xf32>
    %62 = vector.multi_reduction <maximumf>, %61, %cst_26 [1] : vector<1x256xf32> to vector<1xf32>
    %63 = vector.shape_cast %62 : vector<1xf32> to vector<1x1xf32>
    %64 = vector.broadcast %63 : vector<1x1xf32> to vector<1x256xf32>
    %65 = arith.subf %61, %64 : vector<1x256xf32>
    %66 = math.exp %65 : vector<1x256xf32>
    %cst_27 = arith.constant dense<0.000000e+00> : vector<1xf32>
    %67 = vector.multi_reduction <add>, %66, %cst_27 [1] : vector<1x256xf32> to vector<1xf32>
    %68 = vector.shape_cast %67 : vector<1xf32> to vector<1x1xf32>
    %cst_28 = arith.constant dense<0.000000e+00> : vector<4x1xf32>
    %69 = tpu.matmul %58, %66, %cst_28 {dimension_numbers = #tpu.dot_dimension_numbers<[1], [1], [0], [0], [0, 0, 1, 0], [], []>, precision = #tpu.contract_precision<fp32>} : vector<4x256xf32>, vector<1x256xf32>, vector<4x1xf32> -> vector<4x1xf32>
    %70 = vector.broadcast %68 : vector<1x1xf32> to vector<4x1xf32>
    %71 = arith.divf %69, %70 : vector<4x1xf32>
    %c0_29 = arith.constant 0 : index
    %c0_30 = arith.constant 0 : index
    %72 = vector.load %arg2[%c0_29, %c0_30] : memref<4x4xf32, #tpu.memory_space<vmem>>, vector<4x1xf32>
    %c0_31 = arith.constant 0 : index
    %c1_32 = arith.constant 1 : index
    %73 = vector.load %arg2[%c0_31, %c1_32] : memref<4x4xf32, #tpu.memory_space<vmem>>, vector<4x1xf32>
    %c0_33 = arith.constant 0 : index
    %c2_34 = arith.constant 2 : index
    %74 = vector.load %arg2[%c0_33, %c2_34] : memref<4x4xf32, #tpu.memory_space<vmem>>, vector<4x1xf32>
    %c0_35 = arith.constant 0 : index
    %c3_36 = arith.constant 3 : index
    %75 = vector.load %arg2[%c0_35, %c3_36] : memref<4x4xf32, #tpu.memory_space<vmem>>, vector<4x1xf32>
    %76 = arith.mulf %71, %72 : vector<4x1xf32>
    %77 = arith.addf %76, %73 : vector<4x1xf32>
    %78 = vector.shape_cast %77 : vector<4x1xf32> to vector<1x4x1xf32>
    %cst_37 = arith.constant dense<0.000000e+00> : vector<1xf32>
    %79 = vector.multi_reduction <add>, %78, %cst_37 [1, 2] : vector<1x4x1xf32> to vector<1xf32>
    %80 = vector.shape_cast %79 : vector<1xf32> to vector<1x1x1xf32>
    %81 = vector.extract %80[0, 0, 0] : f32 from vector<1x1x1xf32>
    %82 = vector.broadcast %81 : f32 to vector<1x1xf32>
    %cst_38 = arith.constant 4.000000e+00 : f32
    %83 = vector.broadcast %cst_38 : f32 to vector<1x1xf32>
    %84 = arith.divf %82, %83 : vector<1x1xf32>
    %85 = vector.broadcast %84 : vector<1x1xf32> to vector<4x1xf32>
    %86 = arith.subf %77, %85 : vector<4x1xf32>
    %87 = arith.mulf %86, %86 : vector<4x1xf32>
    %88 = vector.shape_cast %87 : vector<4x1xf32> to vector<1x4x1xf32>
    %cst_39 = arith.constant dense<0.000000e+00> : vector<1xf32>
    %89 = vector.multi_reduction <add>, %88, %cst_39 [1, 2] : vector<1x4x1xf32> to vector<1xf32>
    %90 = vector.shape_cast %89 : vector<1xf32> to vector<1x1x1xf32>
    %91 = vector.extract %90[0, 0, 0] : f32 from vector<1x1x1xf32>
    %92 = vector.broadcast %91 : f32 to vector<1x1xf32>
    %cst_40 = arith.constant 4.000000e+00 : f32
    %93 = vector.broadcast %cst_40 : f32 to vector<1x1xf32>
    %94 = arith.divf %92, %93 : vector<1x1xf32>
    %95 = vector.broadcast %84 : vector<1x1xf32> to vector<4x1xf32>
    %96 = arith.subf %77, %95 : vector<4x1xf32>
    %cst_41 = arith.constant 9.99999974E-6 : f32
    %97 = vector.broadcast %cst_41 : f32 to vector<1x1xf32>
    %98 = arith.addf %94, %97 : vector<1x1xf32>
    %99 = math.rsqrt %98 : vector<1x1xf32>
    %100 = vector.broadcast %99 : vector<1x1xf32> to vector<4x1xf32>
    %101 = arith.mulf %96, %100 : vector<4x1xf32>
    %102 = arith.mulf %101, %74 : vector<4x1xf32>
    %103 = arith.addf %102, %75 : vector<4x1xf32>
    %104 = vector.broadcast %1 : f32 to vector<4x1xf32>
    %105 = arith.mulf %104, %103 : vector<4x1xf32>
    %106 = vector.broadcast %105 : vector<4x1xf32> to vector<4x256xf32>
    %107 = arith.addf %58, %106 : vector<4x256xf32>
    %c1_42 = arith.constant 1 : index
    %c0_43 = arith.constant 0 : index
    %c0_44 = arith.constant 0 : index
    %108 = vector.load %arg5[%c1_42, %c0_43, %c0_44] : memref<2x4x256xf32, #tpu.memory_space<vmem>>, vector<1x4x256xf32>
    %109 = vector.shape_cast %108 : vector<1x4x256xf32> to vector<4x256xf32>
    %110 = vector.shape_cast %107 : vector<4x256xf32> to vector<1x4x256xf32>
    tpu.vector_store %arg5[%c1_42, %c0_43, %c0_44], %110 {strides = array<i32>} : memref<2x4x256xf32, #tpu.memory_space<vmem>>, vector<1x4x256xf32>,
    return
  }
  func.func @transform_0(%arg0: i32) -> (i32, i32) {
    %c0_i32 = arith.constant 0 : i32
    %c0_i32_0 = arith.constant 0 : i32
    %c0_i32_1 = arith.constant 0 : i32
    return %c0_i32, %c0_i32_0 : i32, i32
  }
  func.func @transform_1(%arg0: i32) -> (i32, i32) {
    %c0_i32 = arith.constant 0 : i32
    %c0_i32_0 = arith.constant 0 : i32
    %c0_i32_1 = arith.constant 0 : i32
    return %c0_i32, %c0_i32_0 : i32, i32
  }
  func.func @transform_2(%arg0: i32) -> i32 {
    %c0_i32 = arith.constant 0 : i32
    %c0_i32_0 = arith.constant 0 : i32
    return %c0_i32 : i32
  }
  func.func @transform_3(%arg0: i32) -> (i32, i32, i32) {
    %c0_i32 = arith.constant 0 : i32
    %c0_i32_0 = arith.constant 0 : i32
    %c0_i32_1 = arith.constant 0 : i32
    return %arg0, %c0_i32, %c0_i32_0 : i32, i32, i32
  }
  func.func @transform_4(%arg0: i32) -> (i32, i32, i32) {
    %c0_i32 = arith.constant 0 : i32
    %c0_i32_0 = arith.constant 0 : i32
    %c0_i32_1 = arith.constant 0 : i32
    return %arg0, %c0_i32, %c0_i32_0 : i32, i32, i32
  }
}

</mosaic_0001>

<llo_original>
// kernel: gsa_forward.1
$region0: #{gsa_forward.1}
  #allocation0 [shape = 'u32[]', space=smem, size = 0x4, offset = 0x4, fixed_abs, tag = 'smem constant byte address 0x4 - core index']
  #allocation1 [shape = 'u32[144,128]{1,0:T(1,128)}', space=vmem, size = 0x12000, scoped, tag = 'internal scratch']
  %s0 = inlined_call_operand.vmem [shape: f32[1,4], index: 0, kind: input, shape index: {}]
  %s1 = inlined_call_operand.vmem [shape: f32[4,4], index: 1, kind: input, shape index: {}]
  %s2 = inlined_call_operand.vmem [shape: f32[2], index: 2, kind: input, shape index: {}]
  %s3 = inlined_call_operand.vmem [shape: f32[2,4,256], index: 3, kind: input, shape index: {}]
  %s4 = inlined_call_operand.vmem [shape: f32[2,4,256], index: 4, kind: output, shape index: {}]
  %s5 = sld [smem:[#allocation0]]
  $region30: #{gsa_forward.1} parent=0
    _
  %s7 = ssub.s32 1, %s5
  %s8 = scalar_select 0, %s7, %s5
  $region1: #{gsa_forward.1} parent=0
    #allocation2 [shape = 'u8[512]{0}', space=smem, size = 0x200, scoped, tag = 'input window, operand 2, single buffered']
    #allocation3 [shape = 's32[1]{0}', space=sflag, size = 0x4, scoped, tag = 'scoped memory for gsa_forward.1']
    %9 = vsyncpa [#allocation3], 0
    // Predicated region
    $region2: #{gsa_forward.1} parent=1 // pred_check
      _
    $region3: #{gsa_forward.1} parent=1 // pred_check_branch
      %11 = sbr.rel (0) target = $region5
    $region4: #{gsa_forward.1} parent=1 // pred_region
      _
    $region5: #{gsa_forward.1} parent=1 // pred_fallthru
      _
    // Predicated region
    $region6: #{gsa_forward.1} parent=1 // pred_check
      _
    $region7: #{gsa_forward.1} parent=1 // pred_check_branch
      %13 = sbr.rel (0) target = $region9
    $region8: #{gsa_forward.1} parent=1 // pred_region
      _
    $region9: #{gsa_forward.1} parent=1 // pred_fallthru
      _
    // Predicated region
    $region10: #{gsa_forward.1} parent=1 // pred_check
      _
    $region11: #{gsa_forward.1} parent=1 // pred_check_branch
      %15 = sbr.rel (0) target = $region13
    $region12: #{gsa_forward.1} parent=1 // pred_region
      %s17 = ssub.s32 16, 16
      %18 = vsyncadd [#allocation3], %s17
      %s20 = sshll.u32 %s2, 4
      %s21 = int_to_ptr.vmem [resolvable:$true] %s20
      %23 = dma.vmem_to_smem %s21, 16, [#allocation2], [#allocation3]
    $region13: #{gsa_forward.1} parent=1 // pred_fallthru
      _
    // Predicated region
    $region14: #{gsa_forward.1} parent=1 // pred_check
      _
    $region15: #{gsa_forward.1} parent=1 // pred_check_branch
      %25 = sbr.rel (0) target = $region17
    $region16: #{gsa_forward.1} parent=1 // pred_region
      _
    $region17: #{gsa_forward.1} parent=1 // pred_fallthru
      _
    // Predicated region
    $region18: #{gsa_forward.1} parent=1 // pred_check
      _
    $region19: #{gsa_forward.1} parent=1 // pred_check_branch
      %27 = sbr.rel (0) target = $region21
    $region20: #{gsa_forward.1} parent=1 // pred_region
      %28 = dma.done [#allocation3], 16
    $region21: #{gsa_forward.1} parent=1 // pred_fallthru
      _
    %29 = sfence
    %s30 = sld [smem:[#allocation2]]
    %s31 = sld [smem:[#allocation2 + $0x1]]
    %v32 = vld [vmem:[%s0] sm:$0x1]
    %v33 = vld [vmem:[%s3] sm:$0xff]
    %v34 = vstv %s30
    %v36 = vcombine.high %v33, %v33
    %vm37 = vcmask 31744
    %v39 = vsel %vm37, %v32, 0
    %vm41 = vcmask 1043456
    %v42 = vsel %vm41, %v33, 0
    %v44 = vsel %vm41, %v36, 0
    %v46 = vand.u32 %v44, 4294901760
    %47 = vmatprep.subr.mxu0 %v46
    %v48 = vand.u32 %v42, 4294901760
    %49 = vmatpush1.msra.mxu0 %v48
    %50 = vmatprep.subr.mxu0 0.0
    %51 = vmatpush1.msra.mxu0 0.0
    %52 = vmatprep.subr.mxu0 0.0
    %53 = vmatpush1.msra.mxu0 0.0
    %54 = vmatprep.subr.mxu0 0.0
    %55 = vmatpush1.msra.mxu0 0.0
    %56 = vmatprep.subr.mxu0 0.0
    %57 = vmatpush1.msra.mxu0 0.0
    %58 = vmatprep.subr.mxu0 0.0
    %59 = vmatpush1.msra.mxu0 0.0
    %60 = vmatprep.subr.mxu0 0.0
    %61 = vmatpush1.msra.mxu0 0.0
    %62 = vmatprep.subr.mxu0 0.0
    %63 = vmatpush1.msra.mxu0 0.0
    %64 = vmatprep.subr.mxu0 0.0
    %65 = vmatpush1.msra.mxu0 0.0
    %66 = vmatprep.subr.mxu0 0.0
    %67 = vmatpush1.msra.mxu0 0.0
    %68 = vmatprep.subr.mxu0 0.0
    %69 = vmatpush1.msra.mxu0 0.0
    %70 = vmatprep.subr.mxu0 0.0
    %71 = vmatpush1.msra.mxu0 0.0
    %72 = vmatprep.subr.mxu0 0.0
    %73 = vmatpush1.msra.mxu0 0.0
    %74 = vmatprep.subr.mxu0 0.0
    %75 = vmatpush1.msra.mxu0 0.0
    %76 = vmatprep.subr.mxu0 0.0
    %77 = vmatpush1.msra.mxu0 0.0
    %78 = vmatprep.subr.mxu0 0.0
    %79 = vmatpush1.msra.mxu0 0.0
    %80 = vmatprep.subr.mxu0 0.0
    %81 = vmatpush1.msra.mxu0 0.0
    %82 = vmatprep.subr.mxu0 0.0
    %83 = vmatpush1.msra.mxu0 0.0
    %84 = vmatprep.subr.mxu0 0.0
    %85 = vmatpush1.msra.mxu0 0.0
    %86 = vmatprep.subr.mxu0 0.0
    %87 = vmatpush1.msra.mxu0 0.0
    %88 = vmatprep.subr.mxu0 0.0
    %89 = vmatpush1.msra.mxu0 0.0
    %90 = vmatprep.subr.mxu0 0.0
    %91 = vmatpush1.msra.mxu0 0.0
    %92 = vmatprep.subr.mxu0 0.0
    %93 = vmatpush1.msra.mxu0 0.0
    %94 = vmatprep.subr.mxu0 0.0
    %95 = vmatpush1.msra.mxu0 0.0
    %96 = vmatprep.subr.mxu0 0.0
    %97 = vmatpush1.msra.mxu0 0.0
    %98 = vmatprep.subr.mxu0 0.0
    %99 = vmatpush1.msra.mxu0 0.0
    %100 = vmatprep.subr.mxu0 0.0
    %101 = vmatpush1.msra.mxu0 0.0
    %102 = vmatprep.subr.mxu0 0.0
    %103 = vmatpush1.msra.mxu0 0.0
    %104 = vmatprep.subr.mxu0 0.0
    %105 = vmatpush1.msra.mxu0 0.0
    %106 = vmatprep.subr.mxu0 0.0
    %107 = vmatpush1.msra.mxu0 0.0
    %108 = vmatprep.subr.mxu0 0.0
    %109 = vmatpush1.msra.mxu0 0.0
    %110 = vmatprep.subr.mxu0 0.0
    %111 = vmatpush1.msra.mxu0 0.0
    %112 = vmatprep.mubr.f32.mxu0 0.0
    %v113 = vand.u32 %v39, 4294901760
    %v114 = vsub.f32 %v39, %v113
    %v115 = vand.u32 %v114, 4294901760
    %v116 = vsub.f32 %v114, %v115
    %v117 = vand.u32 %v116, 4294901760
    %118 = vmatmul.mubr.f32.gmra.mrb[0].mxu0 %v117
    %v119 = vpop.f32.mrb[0].mxu0
    %v120 = vadd.f32 %v34, %v119
    %v121 = vpop.f32.mrb[0].mxu0
    %v122 = vadd.f32 %v34, %v121
    %123 = vdwg.mxu0
    %v124 = vand.u32 %v44, 4294901760
    %v125 = vsub.f32 %v44, %v124
    %v126 = vand.u32 %v125, 4294901760
    %v127 = vsub.f32 %v125, %v126
    %v128 = vand.u32 %v127, 4294901760
    %129 = vmatprep.subr.mxu0 %v128
    %v130 = vand.u32 %v42, 4294901760
    %v131 = vsub.f32 %v42, %v130
    %v132 = vand.u32 %v131, 4294901760
    %v133 = vsub.f32 %v131, %v132
    %v134 = vand.u32 %v133, 4294901760
    %135 = vmatpush1.msra.mxu0 %v134
    %136 = vmatprep.subr.mxu0 0.0
    %137 = vmatpush1.msra.mxu0 0.0
    %138 = vmatprep.subr.mxu0 0.0
    %139 = vmatpush1.msra.mxu0 0.0
    %140 = vmatprep.subr.mxu0 0.0
    %141 = vmatpush1.msra.mxu0 0.0
    %142 = vmatprep.subr.mxu0 0.0
    %143 = vmatpush1.msra.mxu0 0.0
    %144 = vmatprep.subr.mxu0 0.0
    %145 = vmatpush1.msra.mxu0 0.0
    %146 = vmatprep.subr.mxu0 0.0
    %147 = vmatpush1.msra.mxu0 0.0
    %148 = vmatprep.subr.mxu0 0.0
    %149 = vmatpush1.msra.mxu0 0.0
    %150 = vmatprep.subr.mxu0 0.0
    %151 = vmatpush1.msra.mxu0 0.0
    %152 = vmatprep.subr.mxu0 0.0
    %153 = vmatpush1.msra.mxu0 0.0
    %154 = vmatprep.subr.mxu0 0.0
    %155 = vmatpush1.msra.mxu0 0.0
    %156 = vmatprep.subr.mxu0 0.0
    %157 = vmatpush1.msra.mxu0 0.0
    %158 = vmatprep.subr.mxu0 0.0
    %159 = vmatpush1.msra.mxu0 0.0
    %160 = vmatprep.subr.mxu0 0.0
    %161 = vmatpush1.msra.mxu0 0.0
    %162 = vmatprep.subr.mxu0 0.0
    %163 = vmatpush1.msra.mxu0 0.0
    %164 = vmatprep.subr.mxu0 0.0
    %165 = vmatpush1.msra.mxu0 0.0
    %166 = vmatprep.subr.mxu0 0.0
    %167 = vmatpush1.msra.mxu0 0.0
    %168 = vmatprep.subr.mxu0 0.0
    %169 = vmatpush1.msra.mxu0 0.0
    %170 = vmatprep.subr.mxu0 0.0
    %171 = vmatpush1.msra.mxu0 0.0
    %172 = vmatprep.subr.mxu0 0.0
    %173 = vmatpush1.msra.mxu0 0.0
    %174 = vmatprep.subr.mxu0 0.0
    %175 = vmatpush1.msra.mxu0 0.0
    %176 = vmatprep.subr.mxu0 0.0
    %177 = vmatpush1.msra.mxu0 0.0
    %178 = vmatprep.subr.mxu0 0.0
    %179 = vmatpush1.msra.mxu0 0.0
    %180 = vmatprep.subr.mxu0 0.0
    %181 = vmatpush1.msra.mxu0 0.0
    %182 = vmatprep.subr.mxu0 0.0
    %183 = vmatpush1.msra.mxu0 0.0
    %184 = vmatprep.subr.mxu0 0.0
    %185 = vmatpush1.msra.mxu0 0.0
    %186 = vmatprep.subr.mxu0 0.0
    %187 = vmatpush1.msra.mxu0 0.0
    %188 = vmatprep.subr.mxu0 0.0
    %189 = vmatpush1.msra.mxu0 0.0
    %190 = vmatprep.subr.mxu0 0.0
    %191 = vmatpush1.msra.mxu0 0.0
    %192 = vmatprep.subr.mxu0 0.0
    %193 = vmatpush1.msra.mxu0 0.0
    %194 = vmatprep.subr.mxu0 0.0
    %195 = vmatpush1.msra.mxu0 0.0
    %196 = vmatprep.subr.mxu0 0.0
    %197 = vmatpush1.msra.mxu0 0.0
    %198 = vmatprep.mubr.f32.mxu0 0.0
    %v199 = vand.u32 %v39, 4294901760
    %200 = vmatmul.mubr.f32.gmra.mrb[0].mxu0 %v199
    %v201 = vpop.f32.mrb[0].mxu0
    %v202 = vadd.f32 %v120, %v201
    %v203 = vpop.f32.mrb[0].mxu0
    %v204 = vadd.f32 %v122, %v203
    %205 = vdwg.mxu0
    %v206 = vand.u32 %v44, 4294901760
    %v207 = vsub.f32 %v44, %v206
    %208 = vmatprep.subr.mxu0 %v207
    %v209 = vand.u32 %v42, 4294901760
    %v210 = vsub.f32 %v42, %v209
    %211 = vmatpush1.msra.mxu0 %v210
    %212 = vmatprep.subr.mxu0 0.0
    %213 = vmatpush1.msra.mxu0 0.0
    %214 = vmatprep.subr.mxu0 0.0
    %215 = vmatpush1.msra.mxu0 0.0
    %216 = vmatprep.subr.mxu0 0.0
    %217 = vmatpush1.msra.mxu0 0.0
    %218 = vmatprep.subr.mxu0 0.0
    %219 = vmatpush1.msra.mxu0 0.0
    %220 = vmatprep.subr.mxu0 0.0
    %221 = vmatpush1.msra.mxu0 0.0
    %222 = vmatprep.subr.mxu0 0.0
    %223 = vmatpush1.msra.mxu0 0.0
    %224 = vmatprep.subr.mxu0 0.0
    %225 = vmatpush1.msra.mxu0 0.0
    %226 = vmatprep.subr.mxu0 0.0
    %227 = vmatpush1.msra.mxu0 0.0
    %228 = vmatprep.subr.mxu0 0.0
    %229 = vmatpush1.msra.mxu0 0.0
    %230 = vmatprep.subr.mxu0 0.0
    %231 = vmatpush1.msra.mxu0 0.0
    %232 = vmatprep.subr.mxu0 0.0
    %233 = vmatpush1.msra.mxu0 0.0
    %234 = vmatprep.subr.mxu0 0.0
    %235 = vmatpush1.msra.mxu0 0.0
    %236 = vmatprep.subr.mxu0 0.0
    %237 = vmatpush1.msra.mxu0 0.0
    %238 = vmatprep.subr.mxu0 0.0
    %239 = vmatpush1.msra.mxu0 0.0
    %240 = vmatprep.subr.mxu0 0.0
    %241 = vmatpush1.msra.mxu0 0.0
    %242 = vmatprep.subr.mxu0 0.0
    %243 = vmatpush1.msra.mxu0 0.0
    %244 = vmatprep.subr.mxu0 0.0
    %245 = vmatpush1.msra.mxu0 0.0
    %246 = vmatprep.subr.mxu0 0.0
    %247 = vmatpush1.msra.mxu0 0.0
    %248 = vmatprep.subr.mxu0 0.0
    %249 = vmatpush1.msra.mxu0 0.0
    %250 = vmatprep.subr.mxu0 0.0
    %251 = vmatpush1.msra.mxu0 0.0
    %252 = vmatprep.subr.mxu0 0.0
    %253 = vmatpush1.msra.mxu0 0.0
    %254 = vmatprep.subr.mxu0 0.0
    %255 = vmatpush1.msra.mxu0 0.0
    %256 = vmatprep.subr.mxu0 0.0
    %257 = vmatpush1.msra.mxu0 0.0
    %258 = vmatprep.subr.mxu0 0.0
    %259 = vmatpush1.msra.mxu0 0.0
    %260 = vmatprep.subr.mxu0 0.0
    %261 = vmatpush1.msra.mxu0 0.0
    %262 = vmatprep.subr.mxu0 0.0
    %263 = vmatpush1.msra.mxu0 0.0
    %264 = vmatprep.subr.mxu0 0.0
    %265 = vmatpush1.msra.mxu0 0.0
    %266 = vmatprep.subr.mxu0 0.0
    %267 = vmatpush1.msra.mxu0 0.0
    %268 = vmatprep.subr.mxu0 0.0
    %269 = vmatpush1.msra.mxu0 0.0
    %270 = vmatprep.subr.mxu0 0.0
    %271 = vmatpush1.msra.mxu0 0.0
    %272 = vmatprep.subr.mxu0 0.0
    %273 = vmatpush1.msra.mxu0 0.0
    %274 = vmatprep.mubr.f32.mxu0 0.0
    %v275 = vand.u32 %v39, 4294901760
    %v276 = vsub.f32 %v39, %v275
    %277 = vmatmul.mubr.f32.gmra.mrb[0].mxu0 %v276
    %v278 = vpop.f32.mrb[0].mxu0
    %v279 = vadd.f32 %v202, %v278
    %v280 = vpop.f32.mrb[0].mxu0
    %v281 = vadd.f32 %v204, %v280
    %282 = vdwg.mxu0
    %v283 = vand.u32 %v44, 4294901760
    %284 = vmatprep.subr.mxu0 %v283
    %v285 = vand.u32 %v42, 4294901760
    %286 = vmatpush1.msra.mxu0 %v285
    %287 = vmatprep.subr.mxu0 0.0
    %288 = vmatpush1.msra.mxu0 0.0
    %289 = vmatprep.subr.mxu0 0.0
    %290 = vmatpush1.msra.mxu0 0.0
    %291 = vmatprep.subr.mxu0 0.0
    %292 = vmatpush1.msra.mxu0 0.0
    %293 = vmatprep.subr.mxu0 0.0
    %294 = vmatpush1.msra.mxu0 0.0
    %295 = vmatprep.subr.mxu0 0.0
    %296 = vmatpush1.msra.mxu0 0.0
    %297 = vmatprep.subr.mxu0 0.0
    %298 = vmatpush1.msra.mxu0 0.0
    %299 = vmatprep.subr.mxu0 0.0
    %300 = vmatpush1.msra.mxu0 0.0
    %301 = vmatprep.subr.mxu0 0.0
    %302 = vmatpush1.msra.mxu0 0.0
    %303 = vmatprep.subr.mxu0 0.0
    %304 = vmatpush1.msra.mxu0 0.0
    %305 = vmatprep.subr.mxu0 0.0
    %306 = vmatpush1.msra.mxu0 0.0
    %307 = vmatprep.subr.mxu0 0.0
    %308 = vmatpush1.msra.mxu0 0.0
    %309 = vmatprep.subr.mxu0 0.0
    %310 = vmatpush1.msra.mxu0 0.0
    %311 = vmatprep.subr.mxu0 0.0
    %312 = vmatpush1.msra.mxu0 0.0
    %313 = vmatprep.subr.mxu0 0.0
    %314 = vmatpush1.msra.mxu0 0.0
    %315 = vmatprep.subr.mxu0 0.0
    %316 = vmatpush1.msra.mxu0 0.0
    %317 = vmatprep.subr.mxu0 0.0
    %318 = vmatpush1.msra.mxu0 0.0
    %319 = vmatprep.subr.mxu0 0.0
    %320 = vmatpush1.msra.mxu0 0.0
    %321 = vmatprep.subr.mxu0 0.0
    %322 = vmatpush1.msra.mxu0 0.0
    %323 = vmatprep.subr.mxu0 0.0
    %324 = vmatpush1.msra.mxu0 0.0
    %325 = vmatprep.subr.mxu0 0.0
    %326 = vmatpush1.msra.mxu0 0.0
    %327 = vmatprep.subr.mxu0 0.0
    %328 = vmatpush1.msra.mxu0 0.0
    %329 = vmatprep.subr.mxu0 0.0
    %330 = vmatpush1.msra.mxu0 0.0
    %331 = vmatprep.subr.mxu0 0.0
    %332 = vmatpush1.msra.mxu0 0.0
    %333 = vmatprep.subr.mxu0 0.0
    %334 = vmatpush1.msra.mxu0 0.0
    %335 = vmatprep.subr.mxu0 0.0
    %336 = vmatpush1.msra.mxu0 0.0
    %337 = vmatprep.subr.mxu0 0.0
    %338 = vmatpush1.msra.mxu0 0.0
    %339 = vmatprep.subr.mxu0 0.0
    %340 = vmatpush1.msra.mxu0 0.0
    %341 = vmatprep.subr.mxu0 0.0
    %342 = vmatpush1.msra.mxu0 0.0
    %343 = vmatprep.subr.mxu0 0.0
    %344 = vmatpush1.msra.mxu0 0.0
    %345 = vmatprep.subr.mxu0 0.0
    %346 = vmatpush1.msra.mxu0 0.0
    %347 = vmatprep.subr.mxu0 0.0
    %348 = vmatpush1.msra.mxu0 0.0
    %349 = vmatprep.mubr.f32.mxu0 0.0
    %v350 = vand.u32 %v39, 4294901760
    %v351 = vsub.f32 %v39, %v350
    %v352 = vand.u32 %v351, 4294901760
    %353 = vmatmul.mubr.f32.gmra.mrb[0].mxu0 %v352
    %v354 = vpop.f32.mrb[0].mxu0
    %v355 = vadd.f32 %v279, %v354
    %v356 = vpop.f32.mrb[0].mxu0
    %v357 = vadd.f32 %v281, %v356
    %358 = vdwg.mxu0
    %v359 = vand.u32 %v44, 4294901760
    %v360 = vsub.f32 %v44, %v359
    %v361 = vand.u32 %v360, 4294901760
    %362 = vmatprep.subr.mxu0 %v361
    %v363 = vand.u32 %v42, 4294901760
    %v364 = vsub.f32 %v42, %v363
    %v365 = vand.u32 %v364, 4294901760
    %366 = vmatpush1.msra.mxu0 %v365
    %367 = vmatprep.subr.mxu0 0.0
    %368 = vmatpush1.msra.mxu0 0.0
    %369 = vmatprep.subr.mxu0 0.0
    %370 = vmatpush1.msra.mxu0 0.0
    %371 = vmatprep.subr.mxu0 0.0
    %372 = vmatpush1.msra.mxu0 0.0
    %373 = vmatprep.subr.mxu0 0.0
    %374 = vmatpush1.msra.mxu0 0.0
    %375 = vmatprep.subr.mxu0 0.0
    %376 = vmatpush1.msra.mxu0 0.0
    %377 = vmatprep.subr.mxu0 0.0
    %378 = vmatpush1.msra.mxu0 0.0
    %379 = vmatprep.subr.mxu0 0.0
    %380 = vmatpush1.msra.mxu0 0.0
    %381 = vmatprep.subr.mxu0 0.0
    %382 = vmatpush1.msra.mxu0 0.0
    %383 = vmatprep.subr.mxu0 0.0
    %384 = vmatpush1.msra.mxu0 0.0
    %385 = vmatprep.subr.mxu0 0.0
    %386 = vmatpush1.msra.mxu0 0.0
    %387 = vmatprep.subr.mxu0 0.0
    %388 = vmatpush1.msra.mxu0 0.0
    %389 = vmatprep.subr.mxu0 0.0
    %390 = vmatpush1.msra.mxu0 0.0
    %391 = vmatprep.subr.mxu0 0.0
    %392 = vmatpush1.msra.mxu0 0.0
    %393 = vmatprep.subr.mxu0 0.0
    %394 = vmatpush1.msra.mxu0 0.0
    %395 = vmatprep.subr.mxu0 0.0
    %396 = vmatpush1.msra.mxu0 0.0
    %397 = vmatprep.subr.mxu0 0.0
    %398 = vmatpush1.msra.mxu0 0.0
    %399 = vmatprep.subr.mxu0 0.0
    %400 = vmatpush1.msra.mxu0 0.0
    %401 = vmatprep.subr.mxu0 0.0
    %402 = vmatpush1.msra.mxu0 0.0
    %403 = vmatprep.subr.mxu0 0.0
    %404 = vmatpush1.msra.mxu0 0.0
    %405 = vmatprep.subr.mxu0 0.0
    %406 = vmatpush1.msra.mxu0 0.0
    %407 = vmatprep.subr.mxu0 0.0
    %408 = vmatpush1.msra.mxu0 0.0
    %409 = vmatprep.subr.mxu0 0.0
    %410 = vmatpush1.msra.mxu0 0.0
    %411 = vmatprep.subr.mxu0 0.0
    %412 = vmatpush1.msra.mxu0 0.0
    %413 = vmatprep.subr.mxu0 0.0
    %414 = vmatpush1.msra.mxu0 0.0
    %415 = vmatprep.subr.mxu0 0.0
    %416 = vmatpush1.msra.mxu0 0.0
    %417 = vmatprep.subr.mxu0 0.0
    %418 = vmatpush1.msra.mxu0 0.0
    %419 = vmatprep.subr.mxu0 0.0
    %420 = vmatpush1.msra.mxu0 0.0
    %421 = vmatprep.subr.mxu0 0.0
    %422 = vmatpush1.msra.mxu0 0.0
    %423 = vmatprep.subr.mxu0 0.0
    %424 = vmatpush1.msra.mxu0 0.0
    %425 = vmatprep.subr.mxu0 0.0
    %426 = vmatpush1.msra.mxu0 0.0
    %427 = vmatprep.subr.mxu0 0.0
    %428 = vmatpush1.msra.mxu0 0.0
    %429 = vmatprep.mubr.f32.mxu0 0.0
    %v430 = vand.u32 %v39, 4294901760
    %431 = vmatmul.mubr.f32.gmra.mrb[0].mxu0 %v430
    %v432 = vpop.f32.mrb[0].mxu0
    %v433 = vadd.f32 %v355, %v432
    %v434 = vpop.f32.mrb[0].mxu0
    %v435 = vadd.f32 %v357, %v434
    %436 = vdwg.mxu0
    %v437 = vand.u32 %v44, 4294901760
    %438 = vmatprep.subr.mxu0 %v437
    %v439 = vand.u32 %v42, 4294901760
    %440 = vmatpush1.msra.mxu0 %v439
    %441 = vmatprep.subr.mxu0 0.0
    %442 = vmatpush1.msra.mxu0 0.0
    %443 = vmatprep.subr.mxu0 0.0
    %444 = vmatpush1.msra.mxu0 0.0
    %445 = vmatprep.subr.mxu0 0.0
    %446 = vmatpush1.msra.mxu0 0.0
    %447 = vmatprep.subr.mxu0 0.0
    %448 = vmatpush1.msra.mxu0 0.0
    %449 = vmatprep.subr.mxu0 0.0
    %450 = vmatpush1.msra.mxu0 0.0
    %451 = vmatprep.subr.mxu0 0.0
    %452 = vmatpush1.msra.mxu0 0.0
    %453 = vmatprep.subr.mxu0 0.0
    %454 = vmatpush1.msra.mxu0 0.0
    %455 = vmatprep.subr.mxu0 0.0
    %456 = vmatpush1.msra.mxu0 0.0
    %457 = vmatprep.subr.mxu0 0.0
    %458 = vmatpush1.msra.mxu0 0.0
    %459 = vmatprep.subr.mxu0 0.0
    %460 = vmatpush1.msra.mxu0 0.0
    %461 = vmatprep.subr.mxu0 0.0
    %462 = vmatpush1.msra.mxu0 0.0
    %463 = vmatprep.subr.mxu0 0.0
    %464 = vmatpush1.msra.mxu0 0.0
    %465 = vmatprep.subr.mxu0 0.0
    %466 = vmatpush1.msra.mxu0 0.0
    %467 = vmatprep.subr.mxu0 0.0
    %468 = vmatpush1.msra.mxu0 0.0
    %469 = vmatprep.subr.mxu0 0.0
    %470 = vmatpush1.msra.mxu0 0.0
    %471 = vmatprep.subr.mxu0 0.0
    %472 = vmatpush1.msra.mxu0 0.0
    %473 = vmatprep.subr.mxu0 0.0
    %474 = vmatpush1.msra.mxu0 0.0
    %475 = vmatprep.subr.mxu0 0.0
    %476 = vmatpush1.msra.mxu0 0.0
    %477 = vmatprep.subr.mxu0 0.0
    %478 = vmatpush1.msra.mxu0 0.0
    %479 = vmatprep.subr.mxu0 0.0
    %480 = vmatpush1.msra.mxu0 0.0
    %481 = vmatprep.subr.mxu0 0.0
    %482 = vmatpush1.msra.mxu0 0.0
    %483 = vmatprep.subr.mxu0 0.0
    %484 = vmatpush1.msra.mxu0 0.0
    %485 = vmatprep.subr.mxu0 0.0
    %486 = vmatpush1.msra.mxu0 0.0
    %487 = vmatprep.subr.mxu0 0.0
    %488 = vmatpush1.msra.mxu0 0.0
    %489 = vmatprep.subr.mxu0 0.0
    %490 = vmatpush1.msra.mxu0 0.0
    %491 = vmatprep.subr.mxu0 0.0
    %492 = vmatpush1.msra.mxu0 0.0
    %493 = vmatprep.subr.mxu0 0.0
    %494 = vmatpush1.msra.mxu0 0.0
    %495 = vmatprep.subr.mxu0 0.0
    %496 = vmatpush1.msra.mxu0 0.0
    %497 = vmatprep.subr.mxu0 0.0
    %498 = vmatpush1.msra.mxu0 0.0
    %499 = vmatprep.subr.mxu0 0.0
    %500 = vmatpush1.msra.mxu0 0.0
    %501 = vmatprep.subr.mxu0 0.0
    %502 = vmatpush1.msra.mxu0 0.0
    %503 = vmatprep.mubr.f32.mxu0 0.0
    %v504 = vand.u32 %v39, 4294901760
    %505 = vmatmul.mubr.f32.gmra.mrb[0].mxu0 %v504
    %v506 = vpop.f32.mrb[0].mxu0
    %v507 = vadd.f32 %v433, %v506
    %v508 = vpop.f32.mrb[0].mxu0
    %v509 = vadd.f32 %v435, %v508
    %510 = vdwg.mxu0
    %vm511 = vcmask 1040384
    %v512 = vsel %vm511, %v507, -inf
    %v513 = vsel %vm511, %v509, -inf
    %v514 = vmax.f32 %v512, %v513
    %515 = vmax.xlane.f32.xlu0 %v514
    %v516 = vpop.xlane.xlu0 %515
    %v517 = vsub.f32 %v507, %v516
    %v518 = vsub.f32 %v509, %v516
    %v519 = vmul.f32 %v517, 1.442695
    %v520 = vpow.pop %v519
    %v521 = vmul.f32 %v518, 1.442695
    %v522 = vpow.pop %v521
    %v523 = vsel %vm511, %v520, 0.0
    %v524 = vsel %vm511, %v522, 0.0
    %v525 = vadd.f32 %v523, %v524
    %526 = vadd.xlane.f32.xlu0 %v525
    %v527 = vpop.xlane.xlu0 %526
    %v528 = vlaneseq
    %v529 = vshrl.u32 %v528, 7
    %v530 = vsub.s32 0, %v529
    %v531 = vrot.slane %v520, %v530
    %v532 = vlaneseq
    %v533 = vshrl.u32 %v532, 7
    %v534 = vsub.s32 0, %v533
    %v535 = vrot.slane %v522, %v534
    %v538 = vcombine.low %v531, %v535
    %v540 = vmul.f32 %v33, %v538
    %v542 = vcombine.high %v540, %v540
    %v544 = vsel %vm41, %v540, 0.0
    %v545 = vsel %vm41, %v542, 0.0
    %v546 = vadd.f32 %v544, %v545
    %547 = vadd.xlane.f32.xlu0 %v546
    %v548 = vpop.xlane.xlu0 %547
    %v549 = vlaneseq
    %v550 = vshrl.u32 %v549, 7
    %v551 = vsub.s32 0, %v550
    %v552 = vrot.slane %v527, %v551
    %v553 = vrcp.pop %v552
    %v554 = vmul.f32 %v548, %v553
    %v555 = vld [vmem:[%s1] sm:$0xf]
    %v556 = vmul.f32 %v554, %v555
    %558 = vrot.lane.b32.xlu0 %v555, 127
    %v559 = vpop.permute.xlu0 %558
    %v561 = vadd.f32 %v556, %v559
    %vm562 = vcmask 3072
    %v563 = vsel %vm562, %v561, 0.0
    %564 = vadd.xlane.f32.xlu0 %v563
    %v565 = vpop.xlane.xlu0 %564
    %v566 = vrot.slane %v565, 4
    %v567 = vadd.f32 %v565, %v566
    %v568 = vrot.slane %v567, 2
    %v569 = vadd.f32 %v567, %v568
    %v570 = vrot.slane %v569, 1
    %v571 = vadd.f32 %v569, %v570
    %s572 = vtos %v571
    %v573 = vstv %s572
    %v574 = vrcp.pop 4.0
    %v575 = vmul.f32 %v573, %v574
    %v576 = vsub.f32 %v561, %v575
    %v577 = vmul.f32 %v576, %v576
    %v578 = vsel %vm562, %v577, 0.0
    %579 = vadd.xlane.f32.xlu0 %v578
    %v580 = vpop.xlane.xlu0 %579
    %v581 = vrot.slane %v580, 4
    %v582 = vadd.f32 %v580, %v581
    %v583 = vrot.slane %v582, 2
    %v584 = vadd.f32 %v582, %v583
    %v585 = vrot.slane %v584, 1
    %v586 = vadd.f32 %v584, %v585
    %s587 = vtos %v586
    %v588 = vstv %s587
    %v589 = vmul.f32 %v588, %v574
    %v590 = vadd.f32 %v589, 1e-05
    %v591 = vrsqrt.pop %v590
    %v592 = vmul.f32 %v576, %v591
    %593 = vrot.lane.b32.xlu0 %v555, 126
    %v594 = vpop.permute.xlu0 %593
    %v596 = vmul.f32 %v592, %v594
    %597 = vrot.lane.b32.xlu0 %v555, 125
    %v598 = vpop.permute.xlu0 %597
    %v600 = vadd.f32 %v596, %v598
    %v601 = vstv %s31
    %v602 = vmul.f32 %v601, %v600
    %604 = vset.pattern.permute.xlu0 0
    %605 = vperm.xlu0 %604, %v602
    %v606 = vpop.permute.xlu0 %605
    %v608 = vunpack.c.l.s4 839922192
    %v609 = vunpack.c.0.s8 %v608
    %v610 = vlaneseq
    %v611 = vshrl.u32 %v610, 7
    %v612 = vsub.s32 %v609, %v611
    %v613 = vrot.slane %v606, %v612
    %v615 = vadd.f32 %v33, %v613
    %616 = vst [vmem:[%s4] sm:$0xff] %v615
    %s617 = scalar_lea.vmem %s3, 8
    %v618 = vld [vmem:[%s617] sm:$0xff]
    %v620 = vcombine.high %v618, %v618
    %v621 = vsel %vm41, %v618, 0
    %v623 = vsel %vm41, %v620, 0
    %v625 = vand.u32 %v623, 4294901760
    %626 = vmatprep.subr.mxu0 %v625
    %v627 = vand.u32 %v621, 4294901760
    %628 = vmatpush1.msra.mxu0 %v627
    %629 = vmatprep.subr.mxu0 0.0
    %630 = vmatpush1.msra.mxu0 0.0
    %631 = vmatprep.subr.mxu0 0.0
    %632 = vmatpush1.msra.mxu0 0.0
    %633 = vmatprep.subr.mxu0 0.0
    %634 = vmatpush1.msra.mxu0 0.0
    %635 = vmatprep.subr.mxu0 0.0
    %636 = vmatpush1.msra.mxu0 0.0
    %637 = vmatprep.subr.mxu0 0.0
    %638 = vmatpush1.msra.mxu0 0.0
    %639 = vmatprep.subr.mxu0 0.0
    %640 = vmatpush1.msra.mxu0 0.0
    %641 = vmatprep.subr.mxu0 0.0
    %642 = vmatpush1.msra.mxu0 0.0
    %643 = vmatprep.subr.mxu0 0.0
    %644 = vmatpush1.msra.mxu0 0.0
    %645 = vmatprep.subr.mxu0 0.0
    %646 = vmatpush1.msra.mxu0 0.0
    %647 = vmatprep.subr.mxu0 0.0
    %648 = vmatpush1.msra.mxu0 0.0
    %649 = vmatprep.subr.mxu0 0.0
    %650 = vmatpush1.msra.mxu0 0.0
    %651 = vmatprep.subr.mxu0 0.0
    %652 = vmatpush1.msra.mxu0 0.0
    %653 = vmatprep.subr.mxu0 0.0
    %654 = vmatpush1.msra.mxu0 0.0
    %655 = vmatprep.subr.mxu0 0.0
    %656 = vmatpush1.msra.mxu0 0.0
    %657 = vmatprep.subr.mxu0 0.0
    %658 = vmatpush1.msra.mxu0 0.0
    %659 = vmatprep.subr.mxu0 0.0
    %660 = vmatpush1.msra.mxu0 0.0
    %661 = vmatprep.subr.mxu0 0.0
    %662 = vmatpush1.msra.mxu0 0.0
    %663 = vmatprep.subr.mxu0 0.0
    %664 = vmatpush1.msra.mxu0 0.0
    %665 = vmatprep.subr.mxu0 0.0
    %666 = vmatpush1.msra.mxu0 0.0
    %667 = vmatprep.subr.mxu0 0.0
    %668 = vmatpush1.msra.mxu0 0.0
    %669 = vmatprep.subr.mxu0 0.0
    %670 = vmatpush1.msra.mxu0 0.0
    %671 = vmatprep.subr.mxu0 0.0
    %672 = vmatpush1.msra.mxu0 0.0
    %673 = vmatprep.subr.mxu0 0.0
    %674 = vmatpush1.msra.mxu0 0.0
    %675 = vmatprep.subr.mxu0 0.0
    %676 = vmatpush1.msra.mxu0 0.0
    %677 = vmatprep.subr.mxu0 0.0
    %678 = vmatpush1.msra.mxu0 0.0
    %679 = vmatprep.subr.mxu0 0.0
    %680 = vmatpush1.msra.mxu0 0.0
    %681 = vmatprep.subr.mxu0 0.0
    %682 = vmatpush1.msra.mxu0 0.0
    %683 = vmatprep.subr.mxu0 0.0
    %684 = vmatpush1.msra.mxu0 0.0
    %685 = vmatprep.subr.mxu0 0.0
    %686 = vmatpush1.msra.mxu0 0.0
    %687 = vmatprep.subr.mxu0 0.0
    %688 = vmatpush1.msra.mxu0 0.0
    %689 = vmatprep.subr.mxu0 0.0
    %690 = vmatpush1.msra.mxu0 0.0
    %691 = vmatprep.mubr.f32.mxu0 0.0
    %v692 = vand.u32 %v39, 4294901760
    %v693 = vsub.f32 %v39, %v692
    %v694 = vand.u32 %v693, 4294901760
    %v695 = vsub.f32 %v693, %v694
    %v696 = vand.u32 %v695, 4294901760
    %697 = vmatmul.mubr.f32.gmra.mrb[0].mxu0 %v696
    %v698 = vpop.f32.mrb[0].mxu0
    %v699 = vadd.f32 %v34, %v698
    %v700 = vpop.f32.mrb[0].mxu0
    %v701 = vadd.f32 %v34, %v700
    %702 = vdwg.mxu0
    %v703 = vand.u32 %v623, 4294901760
    %v704 = vsub.f32 %v623, %v703
    %v705 = vand.u32 %v704, 4294901760
    %v706 = vsub.f32 %v704, %v705
    %v707 = vand.u32 %v706, 4294901760
    %708 = vmatprep.subr.mxu0 %v707
    %v709 = vand.u32 %v621, 4294901760
    %v710 = vsub.f32 %v621, %v709
    %v711 = vand.u32 %v710, 4294901760
    %v712 = vsub.f32 %v710, %v711
    %v713 = vand.u32 %v712, 4294901760
    %714 = vmatpush1.msra.mxu0 %v713
    %715 = vmatprep.subr.mxu0 0.0
    %716 = vmatpush1.msra.mxu0 0.0
    %717 = vmatprep.subr.mxu0 0.0
    %718 = vmatpush1.msra.mxu0 0.0
    %719 = vmatprep.subr.mxu0 0.0
    %720 = vmatpush1.msra.mxu0 0.0
    %721 = vmatprep.subr.mxu0 0.0
    %722 = vmatpush1.msra.mxu0 0.0
    %723 = vmatprep.subr.mxu0 0.0
    %724 = vmatpush1.msra.mxu0 0.0
    %725 = vmatprep.subr.mxu0 0.0
    %726 = vmatpush1.msra.mxu0 0.0
    %727 = vmatprep.subr.mxu0 0.0
    %728 = vmatpush1.msra.mxu0 0.0
    %729 = vmatprep.subr.mxu0 0.0
    %730 = vmatpush1.msra.mxu0 0.0
    %731 = vmatprep.subr.mxu0 0.0
    %732 = vmatpush1.msra.mxu0 0.0
    %733 = vmatprep.subr.mxu0 0.0
    %734 = vmatpush1.msra.mxu0 0.0
    %735 = vmatprep.subr.mxu0 0.0
    %736 = vmatpush1.msra.mxu0 0.0
    %737 = vmatprep.subr.mxu0 0.0
    %738 = vmatpush1.msra.mxu0 0.0
    %739 = vmatprep.subr.mxu0 0.0
    %740 = vmatpush1.msra.mxu0 0.0
    %741 = vmatprep.subr.mxu0 0.0
    %742 = vmatpush1.msra.mxu0 0.0
    %743 = vmatprep.subr.mxu0 0.0
    %744 = vmatpush1.msra.mxu0 0.0
    %745 = vmatprep.subr.mxu0 0.0
    %746 = vmatpush1.msra.mxu0 0.0
    %747 = vmatprep.subr.mxu0 0.0
    %748 = vmatpush1.msra.mxu0 0.0
    %749 = vmatprep.subr.mxu0 0.0
    %750 = vmatpush1.msra.mxu0 0.0
    %751 = vmatprep.subr.mxu0 0.0
    %752 = vmatpush1.msra.mxu0 0.0
    %753 = vmatprep.subr.mxu0 0.0
    %754 = vmatpush1.msra.mxu0 0.0
    %755 = vmatprep.subr.mxu0 0.0
    %756 = vmatpush1.msra.mxu0 0.0
    %757 = vmatprep.subr.mxu0 0.0
    %758 = vmatpush1.msra.mxu0 0.0
    %759 = vmatprep.subr.mxu0 0.0
    %760 = vmatpush1.msra.mxu0 0.0
    %761 = vmatprep.subr.mxu0 0.0
    %762 = vmatpush1.msra.mxu0 0.0
    %763 = vmatprep.subr.mxu0 0.0
    %764 = vmatpush1.msra.mxu0 0.0
    %765 = vmatprep.subr.mxu0 0.0
    %766 = vmatpush1.msra.mxu0 0.0
    %767 = vmatprep.subr.mxu0 0.0
    %768 = vmatpush1.msra.mxu0 0.0
    %769 = vmatprep.subr.mxu0 0.0
    %770 = vmatpush1.msra.mxu0 0.0
    %771 = vmatprep.subr.mxu0 0.0
    %772 = vmatpush1.msra.mxu0 0.0
    %773 = vmatprep.subr.mxu0 0.0
    %774 = vmatpush1.msra.mxu0 0.0
    %775 = vmatprep.subr.mxu0 0.0
    %776 = vmatpush1.msra.mxu0 0.0
    %777 = vmatprep.mubr.f32.mxu0 0.0
    %v778 = vand.u32 %v39, 4294901760
    %779 = vmatmul.mubr.f32.gmra.mrb[0].mxu0 %v778
    %v780 = vpop.f32.mrb[0].mxu0
    %v781 = vadd.f32 %v699, %v780
    %v782 = vpop.f32.mrb[0].mxu0
    %v783 = vadd.f32 %v701, %v782
    %784 = vdwg.mxu0
    %v785 = vand.u32 %v623, 4294901760
    %v786 = vsub.f32 %v623, %v785
    %787 = vmatprep.subr.mxu0 %v786
    %v788 = vand.u32 %v621, 4294901760
    %v789 = vsub.f32 %v621, %v788
    %790 = vmatpush1.msra.mxu0 %v789
    %791 = vmatprep.subr.mxu0 0.0
    %792 = vmatpush1.msra.mxu0 0.0
    %793 = vmatprep.subr.mxu0 0.0
    %794 = vmatpush1.msra.mxu0 0.0
    %795 = vmatprep.subr.mxu0 0.0
    %796 = vmatpush1.msra.mxu0 0.0
    %797 = vmatprep.subr.mxu0 0.0
    %798 = vmatpush1.msra.mxu0 0.0
    %799 = vmatprep.subr.mxu0 0.0
    %800 = vmatpush1.msra.mxu0 0.0
    %801 = vmatprep.subr.mxu0 0.0
    %802 = vmatpush1.msra.mxu0 0.0
    %803 = vmatprep.subr.mxu0 0.0
    %804 = vmatpush1.msra.mxu0 0.0
    %805 = vmatprep.subr.mxu0 0.0
    %806 = vmatpush1.msra.mxu0 0.0
    %807 = vmatprep.subr.mxu0 0.0
    %808 = vmatpush1.msra.mxu0 0.0
    %809 = vmatprep.subr.mxu0 0.0
    %810 = vmatpush1.msra.mxu0 0.0
    %811 = vmatprep.subr.mxu0 0.0
    %812 = vmatpush1.msra.mxu0 0.0
    %813 = vmatprep.subr.mxu0 0.0
    %814 = vmatpush1.msra.mxu0 0.0
    %815 = vmatprep.subr.mxu0 0.0
    %816 = vmatpush1.msra.mxu0 0.0
    %817 = vmatprep.subr.mxu0 0.0
    %818 = vmatpush1.msra.mxu0 0.0
    %819 = vmatprep.subr.mxu0 0.0
    %820 = vmatpush1.msra.mxu0 0.0
    %821 = vmatprep.subr.mxu0 0.0
    %822 = vmatpush1.msra.mxu0 0.0
    %823 = vmatprep.subr.mxu0 0.0
    %824 = vmatpush1.msra.mxu0 0.0
    %825 = vmatprep.subr.mxu0 0.0
    %826 = vmatpush1.msra.mxu0 0.0
    %827 = vmatprep.subr.mxu0 0.0
    %828 = vmatpush1.msra.mxu0 0.0
    %829 = vmatprep.subr.mxu0 0.0
    %830 = vmatpush1.msra.mxu0 0.0
    %831 = vmatprep.subr.mxu0 0.0
    %832 = vmatpush1.msra.mxu0 0.0
    %833 = vmatprep.subr.mxu0 0.0
    %834 = vmatpush1.msra.mxu0 0.0
    %835 = vmatprep.subr.mxu0 0.0
    %836 = vmatpush1.msra.mxu0 0.0
    %837 = vmatprep.subr.mxu0 0.0
    %838 = vmatpush1.msra.mxu0 0.0
    %839 = vmatprep.subr.mxu0 0.0
    %840 = vmatpush1.msra.mxu0 0.0
    %841 = vmatprep.subr.mxu0 0.0
    %842 = vmatpush1.msra.mxu0 0.0
    %843 = vmatprep.subr.mxu0 0.0
    %844 = vmatpush1.msra.mxu0 0.0
    %845 = vmatprep.subr.mxu0 0.0
    %846 = vmatpush1.msra.mxu0 0.0
    %847 = vmatprep.subr.mxu0 0.0
    %848 = vmatpush1.msra.mxu0 0.0
    %849 = vmatprep.subr.mxu0 0.0
    %850 = vmatpush1.msra.mxu0 0.0
    %851 = vmatprep.subr.mxu0 0.0
    %852 = vmatpush1.msra.mxu0 0.0
    %853 = vmatprep.mubr.f32.mxu0 0.0
    %v854 = vand.u32 %v39, 4294901760
    %v855 = vsub.f32 %v39, %v854
    %856 = vmatmul.mubr.f32.gmra.mrb[0].mxu0 %v855
    %v857 = vpop.f32.mrb[0].mxu0
    %v858 = vadd.f32 %v781, %v857
    %v859 = vpop.f32.mrb[0].mxu0
    %v860 = vadd.f32 %v783, %v859
    %861 = vdwg.mxu0
    %v862 = vand.u32 %v623, 4294901760
    %863 = vmatprep.subr.mxu0 %v862
    %v864 = vand.u32 %v621, 4294901760
    %865 = vmatpush1.msra.mxu0 %v864
    %866 = vmatprep.subr.mxu0 0.0
    %867 = vmatpush1.msra.mxu0 0.0
    %868 = vmatprep.subr.mxu0 0.0
    %869 = vmatpush1.msra.mxu0 0.0
    %870 = vmatprep.subr.mxu0 0.0
    %871 = vmatpush1.msra.mxu0 0.0
    %872 = vmatprep.subr.mxu0 0.0
    %873 = vmatpush1.msra.mxu0 0.0
    %874 = vmatprep.subr.mxu0 0.0
    %875 = vmatpush1.msra.mxu0 0.0
    %876 = vmatprep.subr.mxu0 0.0
    %877 = vmatpush1.msra.mxu0 0.0
    %878 = vmatprep.subr.mxu0 0.0
    %879 = vmatpush1.msra.mxu0 0.0
    %880 = vmatprep.subr.mxu0 0.0
    %881 = vmatpush1.msra.mxu0 0.0
    %882 = vmatprep.subr.mxu0 0.0
    %883 = vmatpush1.msra.mxu0 0.0
    %884 = vmatprep.subr.mxu0 0.0
    %885 = vmatpush1.msra.mxu0 0.0
    %886 = vmatprep.subr.mxu0 0.0
    %887 = vmatpush1.msra.mxu0 0.0
    %888 = vmatprep.subr.mxu0 0.0
    %889 = vmatpush1.msra.mxu0 0.0
    %890 = vmatprep.subr.mxu0 0.0
    %891 = vmatpush1.msra.mxu0 0.0
    %892 = vmatprep.subr.mxu0 0.0
    %893 = vmatpush1.msra.mxu0 0.0
    %894 = vmatprep.subr.mxu0 0.0
    %895 = vmatpush1.msra.mxu0 0.0
    %896 = vmatprep.subr.mxu0 0.0
    %897 = vmatpush1.msra.mxu0 0.0
    %898 = vmatprep.subr.mxu0 0.0
    %899 = vmatpush1.msra.mxu0 0.0
    %900 = vmatprep.subr.mxu0 0.0
    %901 = vmatpush1.msra.mxu0 0.0
    %902 = vmatprep.subr.mxu0 0.0
    %903 = vmatpush1.msra.mxu0 0.0
    %904 = vmatprep.subr.mxu0 0.0
    %905 = vmatpush1.msra.mxu0 0.0
    %906 = vmatprep.subr.mxu0 0.0
    %907 = vmatpush1.msra.mxu0 0.0
    %908 = vmatprep.subr.mxu0 0.0
    %909 = vmatpush1.msra.mxu0 0.0
    %910 = vmatprep.subr.mxu0 0.0
    %911 = vmatpush1.msra.mxu0 0.0
    %912 = vmatprep.subr.mxu0 0.0
    %913 = vmatpush1.msra.mxu0 0.0
    %914 = vmatprep.subr.mxu0 0.0
    %915 = vmatpush1.msra.mxu0 0.0
    %916 = vmatprep.subr.mxu0 0.0
    %917 = vmatpush1.msra.mxu0 0.0
    %918 = vmatprep.subr.mxu0 0.0
    %919 = vmatpush1.msra.mxu0 0.0
    %920 = vmatprep.subr.mxu0 0.0
    %921 = vmatpush1.msra.mxu0 0.0
    %922 = vmatprep.subr.mxu0 0.0
    %923 = vmatpush1.msra.mxu0 0.0
    %924 = vmatprep.subr.mxu0 0.0
    %925 = vmatpush1.msra.mxu0 0.0
    %926 = vmatprep.subr.mxu0 0.0
    %927 = vmatpush1.msra.mxu0 0.0
    %928 = vmatprep.mubr.f32.mxu0 0.0
    %v929 = vand.u32 %v39, 4294901760
    %v930 = vsub.f32 %v39, %v929
    %v931 = vand.u32 %v930, 4294901760
    %932 = vmatmul.mubr.f32.gmra.mrb[0].mxu0 %v931
    %v933 = vpop.f32.mrb[0].mxu0
    %v934 = vadd.f32 %v858, %v933
    %v935 = vpop.f32.mrb[0].mxu0
    %v936 = vadd.f32 %v860, %v935
    %937 = vdwg.mxu0
    %v938 = vand.u32 %v623, 4294901760
    %v939 = vsub.f32 %v623, %v938
    %v940 = vand.u32 %v939, 4294901760
    %941 = vmatprep.subr.mxu0 %v940
    %v942 = vand.u32 %v621, 4294901760
    %v943 = vsub.f32 %v621, %v942
    %v944 = vand.u32 %v943, 4294901760
    %945 = vmatpush1.msra.mxu0 %v944
    %946 = vmatprep.subr.mxu0 0.0
    %947 = vmatpush1.msra.mxu0 0.0
    %948 = vmatprep.subr.mxu0 0.0
    %949 = vmatpush1.msra.mxu0 0.0
    %950 = vmatprep.subr.mxu0 0.0
    %951 = vmatpush1.msra.mxu0 0.0
    %952 = vmatprep.subr.mxu0 0.0
    %953 = vmatpush1.msra.mxu0 0.0
    %954 = vmatprep.subr.mxu0 0.0
    %955 = vmatpush1.msra.mxu0 0.0
    %956 = vmatprep.subr.mxu0 0.0
    %957 = vmatpush1.msra.mxu0 0.0
    %958 = vmatprep.subr.mxu0 0.0
    %959 = vmatpush1.msra.mxu0 0.0
    %960 = vmatprep.subr.mxu0 0.0
    %961 = vmatpush1.msra.mxu0 0.0
    %962 = vmatprep.subr.mxu0 0.0
    %963 = vmatpush1.msra.mxu0 0.0
    %964 = vmatprep.subr.mxu0 0.0
    %965 = vmatpush1.msra.mxu0 0.0
    %966 = vmatprep.subr.mxu0 0.0
    %967 = vmatpush1.msra.mxu0 0.0
    %968 = vmatprep.subr.mxu0 0.0
    %969 = vmatpush1.msra.mxu0 0.0
    %970 = vmatprep.subr.mxu0 0.0
    %971 = vmatpush1.msra.mxu0 0.0
    %972 = vmatprep.subr.mxu0 0.0
    %973 = vmatpush1.msra.mxu0 0.0
    %974 = vmatprep.subr.mxu0 0.0
    %975 = vmatpush1.msra.mxu0 0.0
    %976 = vmatprep.subr.mxu0 0.0
    %977 = vmatpush1.msra.mxu0 0.0
    %978 = vmatprep.subr.mxu0 0.0
    %979 = vmatpush1.msra.mxu0 0.0
    %980 = vmatprep.subr.mxu0 0.0
    %981 = vmatpush1.msra.mxu0 0.0
    %982 = vmatprep.subr.mxu0 0.0
    %983 = vmatpush1.msra.mxu0 0.0
    %984 = vmatprep.subr.mxu0 0.0
    %985 = vmatpush1.msra.mxu0 0.0
    %986 = vmatprep.subr.mxu0 0.0
    %987 = vmatpush1.msra.mxu0 0.0
    %988 = vmatprep.subr.mxu0 0.0
    %989 = vmatpush1.msra.mxu0 0.0
    %990 = vmatprep.subr.mxu0 0.0
    %991 = vmatpush1.msra.mxu0 0.0
    %992 = vmatprep.subr.mxu0 0.0
    %993 = vmatpush1.msra.mxu0 0.0
    %994 = vmatprep.subr.mxu0 0.0
    %995 = vmatpush1.msra.mxu0 0.0
    %996 = vmatprep.subr.mxu0 0.0
    %997 = vmatpush1.msra.mxu0 0.0
    %998 = vmatprep.subr.mxu0 0.0
    %999 = vmatpush1.msra.mxu0 0.0
    %1000 = vmatprep.subr.mxu0 0.0
    %1001 = vmatpush1.msra.mxu0 0.0
    %1002 = vmatprep.subr.mxu0 0.0
    %1003 = vmatpush1.msra.mxu0 0.0
    %1004 = vmatprep.subr.mxu0 0.0
    %1005 = vmatpush1.msra.mxu0 0.0
    %1006 = vmatprep.subr.mxu0 0.0
    %1007 = vmatpush1.msra.mxu0 0.0
    %1008 = vmatprep.mubr.f32.mxu0 0.0
    %v1009 = vand.u32 %v39, 4294901760
    %1010 = vmatmul.mubr.f32.gmra.mrb[0].mxu0 %v1009
    %v1011 = vpop.f32.mrb[0].mxu0
    %v1012 = vadd.f32 %v934, %v1011
    %v1013 = vpop.f32.mrb[0].mxu0
    %v1014 = vadd.f32 %v936, %v1013
    %1015 = vdwg.mxu0
    %v1016 = vand.u32 %v623, 4294901760
    %1017 = vmatprep.subr.mxu0 %v1016
    %v1018 = vand.u32 %v621, 4294901760
    %1019 = vmatpush1.msra.mxu0 %v1018
    %1020 = vmatprep.subr.mxu0 0.0
    %1021 = vmatpush1.msra.mxu0 0.0
    %1022 = vmatprep.subr.mxu0 0.0
    %1023 = vmatpush1.msra.mxu0 0.0
    %1024 = vmatprep.subr.mxu0 0.0
    %1025 = vmatpush1.msra.mxu0 0.0
    %1026 = vmatprep.subr.mxu0 0.0
    %1027 = vmatpush1.msra.mxu0 0.0
    %1028 = vmatprep.subr.mxu0 0.0
    %1029 = vmatpush1.msra.mxu0 0.0
    %1030 = vmatprep.subr.mxu0 0.0
    %1031 = vmatpush1.msra.mxu0 0.0
    %1032 = vmatprep.subr.mxu0 0.0
    %1033 = vmatpush1.msra.mxu0 0.0
    %1034 = vmatprep.subr.mxu0 0.0
    %1035 = vmatpush1.msra.mxu0 0.0
    %1036 = vmatprep.subr.mxu0 0.0
    %1037 = vmatpush1.msra.mxu0 0.0
    %1038 = vmatprep.subr.mxu0 0.0
    %1039 = vmatpush1.msra.mxu0 0.0
    %1040 = vmatprep.subr.mxu0 0.0
    %1041 = vmatpush1.msra.mxu0 0.0
    %1042 = vmatprep.subr.mxu0 0.0
    %1043 = vmatpush1.msra.mxu0 0.0
    %1044 = vmatprep.subr.mxu0 0.0
    %1045 = vmatpush1.msra.mxu0 0.0
    %1046 = vmatprep.subr.mxu0 0.0
    %1047 = vmatpush1.msra.mxu0 0.0
    %1048 = vmatprep.subr.mxu0 0.0
    %1049 = vmatpush1.msra.mxu0 0.0
    %1050 = vmatprep.subr.mxu0 0.0
    %1051 = vmatpush1.msra.mxu0 0.0
    %1052 = vmatprep.subr.mxu0 0.0
    %1053 = vmatpush1.msra.mxu0 0.0
    %1054 = vmatprep.subr.mxu0 0.0
    %1055 = vmatpush1.msra.mxu0 0.0
    %1056 = vmatprep.subr.mxu0 0.0
    %1057 = vmatpush1.msra.mxu0 0.0
    %1058 = vmatprep.subr.mxu0 0.0
    %1059 = vmatpush1.msra.mxu0 0.0
    %1060 = vmatprep.subr.mxu0 0.0
    %1061 = vmatpush1.msra.mxu0 0.0
    %1062 = vmatprep.subr.mxu0 0.0
    %1063 = vmatpush1.msra.mxu0 0.0
    %1064 = vmatprep.subr.mxu0 0.0
    %1065 = vmatpush1.msra.mxu0 0.0
    %1066 = vmatprep.subr.mxu0 0.0
    %1067 = vmatpush1.msra.mxu0 0.0
    %1068 = vmatprep.subr.mxu0 0.0
    %1069 = vmatpush1.msra.mxu0 0.0
    %1070 = vmatprep.subr.mxu0 0.0
    %1071 = vmatpush1.msra.mxu0 0.0
    %1072 = vmatprep.subr.mxu0 0.0
    %1073 = vmatpush1.msra.mxu0 0.0
    %1074 = vmatprep.subr.mxu0 0.0
    %1075 = vmatpush1.msra.mxu0 0.0
    %1076 = vmatprep.subr.mxu0 0.0
    %1077 = vmatpush1.msra.mxu0 0.0
    %1078 = vmatprep.subr.mxu0 0.0
    %1079 = vmatpush1.msra.mxu0 0.0
    %1080 = vmatprep.subr.mxu0 0.0
    %1081 = vmatpush1.msra.mxu0 0.0
    %1082 = vmatprep.mubr.f32.mxu0 0.0
    %v1083 = vand.u32 %v39, 4294901760
    %1084 = vmatmul.mubr.f32.gmra.mrb[0].mxu0 %v1083
    %v1085 = vpop.f32.mrb[0].mxu0
    %v1086 = vadd.f32 %v1012, %v1085
    %v1087 = vpop.f32.mrb[0].mxu0
    %v1088 = vadd.f32 %v1014, %v1087
    %1089 = vdwg.mxu0
    %v1090 = vsel %vm511, %v1086, -inf
    %v1091 = vsel %vm511, %v1088, -inf
    %v1092 = vmax.f32 %v1090, %v1091
    %1093 = vmax.xlane.f32.xlu0 %v1092
    %v1094 = vpop.xlane.xlu0 %1093
    %v1095 = vsub.f32 %v1086, %v1094
    %v1096 = vsub.f32 %v1088, %v1094
    %v1097 = vmul.f32 %v1095, 1.442695
    %v1098 = vpow.pop %v1097
    %v1099 = vmul.f32 %v1096, 1.442695
    %v1100 = vpow.pop %v1099
    %v1101 = vsel %vm511, %v1098, 0.0
    %v1102 = vsel %vm511, %v1100, 0.0
    %v1103 = vadd.f32 %v1101, %v1102
    %1104 = vadd.xlane.f32.xlu0 %v1103
    %v1105 = vpop.xlane.xlu0 %1104
    %v1106 = vlaneseq
    %v1107 = vshrl.u32 %v1106, 7
    %v1108 = vsub.s32 0, %v1107
    %v1109 = vrot.slane %v1098, %v1108
    %v1110 = vlaneseq
    %v1111 = vshrl.u32 %v1110, 7
    %v1112 = vsub.s32 0, %v1111
    %v1113 = vrot.slane %v1100, %v1112
    %v1116 = vcombine.low %v1109, %v1113
    %v1118 = vmul.f32 %v618, %v1116
    %v1120 = vcombine.high %v1118, %v1118
    %v1122 = vsel %vm41, %v1118, 0.0
    %v1123 = vsel %vm41, %v1120, 0.0
    %v1124 = vadd.f32 %v1122, %v1123
    %1125 = vadd.xlane.f32.xlu0 %v1124
    %v1126 = vpop.xlane.xlu0 %1125
    %v1127 = vlaneseq
    %v1128 = vshrl.u32 %v1127, 7
    %v1129 = vsub.s32 0, %v1128
    %v1130 = vrot.slane %v1105, %v1129
    %v1131 = vrcp.pop %v1130
    %v1132 = vmul.f32 %v1126, %v1131
    %v1133 = vld [vmem:[%s1] sm:$0xf]
    %v1134 = vmul.f32 %v1132, %v1133
    %1136 = vrot.lane.b32.xlu0 %v1133, 127
    %v1137 = vpop.permute.xlu0 %1136
    %v1139 = vadd.f32 %v1134, %v1137
    %v1140 = vsel %vm562, %v1139, 0.0
    %1141 = vadd.xlane.f32.xlu0 %v1140
    %v1142 = vpop.xlane.xlu0 %1141
    %v1143 = vrot.slane %v1142, 4
    %v1144 = vadd.f32 %v1142, %v1143
    %v1145 = vrot.slane %v1144, 2
    %v1146 = vadd.f32 %v1144, %v1145
    %v1147 = vrot.slane %v1146, 1
    %v1148 = vadd.f32 %v1146, %v1147
    %s1149 = vtos %v1148
    %v1150 = vstv %s1149
    %v1151 = vmul.f32 %v1150, %v574
    %v1152 = vsub.f32 %v1139, %v1151
    %v1153 = vmul.f32 %v1152, %v1152
    %v1154 = vsel %vm562, %v1153, 0.0
    %1155 = vadd.xlane.f32.xlu0 %v1154
    %v1156 = vpop.xlane.xlu0 %1155
    %v1157 = vrot.slane %v1156, 4
    %v1158 = vadd.f32 %v1156, %v1157
    %v1159 = vrot.slane %v1158, 2
    %v1160 = vadd.f32 %v1158, %v1159
    %v1161 = vrot.slane %v1160, 1
    %v1162 = vadd.f32 %v1160, %v1161
    %s1163 = vtos %v1162
    %v1164 = vstv %s1163
    %v1165 = vmul.f32 %v1164, %v574
    %v1166 = vadd.f32 %v1165, 1e-05
    %v1167 = vrsqrt.pop %v1166
    %v1168 = vmul.f32 %v1152, %v1167
    %1169 = vrot.lane.b32.xlu0 %v1133, 126
    %v1170 = vpop.permute.xlu0 %1169
    %v1172 = vmul.f32 %v1168, %v1170
    %1173 = vrot.lane.b32.xlu0 %v1133, 125
    %v1174 = vpop.permute.xlu0 %1173
    %v1176 = vadd.f32 %v1172, %v1174
    %v1177 = vmul.f32 %v601, %v1176
    %1179 = vset.pattern.permute.xlu0 0
    %1180 = vperm.xlu0 %1179, %v1177
    %v1181 = vpop.permute.xlu0 %1180
    %v1183 = vunpack.c.l.s4 839922192
    %v1184 = vunpack.c.0.s8 %v1183
    %v1185 = vlaneseq
    %v1186 = vshrl.u32 %v1185, 7
    %v1187 = vsub.s32 %v1184, %v1186
    %v1188 = vrot.slane %v1181, %v1187
    %v1190 = vadd.f32 %v618, %v1188
    %s1191 = scalar_lea.vmem %s4, 8
    %1192 = vst [vmem:[%s1191] sm:$0xff] %v1190
    // Predicated region
    $region22: #{gsa_forward.1} parent=1 // pred_check
      _
    $region23: #{gsa_forward.1} parent=1 // pred_check_branch
      %1194 = sbr.rel (0) target = $region25
    $region24: #{gsa_forward.1} parent=1 // pred_region
      _
    $region25: #{gsa_forward.1} parent=1 // pred_fallthru
      _
    // Predicated region
    $region26: #{gsa_forward.1} parent=1 // pred_check
      _
    $region27: #{gsa_forward.1} parent=1 // pred_check_branch
      %1196 = sbr.rel (0) target = $region29
    $region28: #{gsa_forward.1} parent=1 // pred_region
      _
    $region29: #{gsa_forward.1} parent=1 // pred_fallthru
      _
    %1197 = vsyncpa [#allocation3], 1

</llo_original>
